<compile_context>
chip_gen: v7x
topology: tpu7x:2x2x1
jax: 0.10.0
libtpu: 0.0.40
codegen_flags: <defaults>
</compile_context>

<pallas_src>
import functools

import jax
import jax.numpy as jnp
import numpy as np
from jax.experimental import pallas as pl
from jax.experimental.pallas import tpu as pltpu


def _psa_kernel(x_ref,
                w_chwq_ref,
                w_chwv_t_ref, b_chwv_ref,
                w_chwz_t_ref, b_chwz_ref,
                gamma_ref, beta_ref,
                w_spwq_t_ref, b_spwq_ref,
                w_spwv_ref, b_spwv_ref,
                out_ref, *, tb):
    # x_ref block: (TB, C, HW) — C on sublanes, HW on lanes.
    for b in range(tb):  # TB is small and static; unrolled.
        xb = x_ref[b]                                                     # (C, HW)

        # ---------------- channel branch (collapsed) ----------------
        # q = softmax over HW of (w_q . x); the scalar conv bias cancels in softmax.
        q_logits = jnp.sum(xb * w_chwq_ref[...], axis=0, keepdims=True)   # (1, HW)
        m = jnp.max(q_logits, axis=1, keepdims=True)
        e = jnp.exp(q_logits - m)
        q = e / jnp.sum(e, axis=1, keepdims=True)                         # (1, HW)

        # chwz = Wv @ (x q) + b_v   (valid: softmax weights sum to 1).
        qx = jnp.sum(xb * q, axis=1, keepdims=True)                       # (C, 1)
        chwz = jnp.dot(w_chwv_t_ref[...], qx,
                       preferred_element_type=jnp.float32) + b_chwv_ref[...]   # (Ch, 1)
        z = jnp.dot(w_chwz_t_ref[...], chwz,
                    preferred_element_type=jnp.float32) + b_chwz_ref[...]       # (C, 1)

        # LayerNorm over channels (sublane axis), eps = 1e-5 (torch default).
        mu = jnp.mean(z, axis=0, keepdims=True)
        zc = z - mu
        var = jnp.mean(zc * zc, axis=0, keepdims=True)
        ln = zc * jax.lax.rsqrt(var + 1e-5) * gamma_ref[...] + beta_ref[...]    # (C, 1)
        cw = jax.nn.sigmoid(ln)                                           # (C, 1)

        # ---------------- spatial branch (collapsed) ----------------
        # mean over HW commutes with the 1x1 conv.
        mean_x = jnp.mean(xb, axis=1, keepdims=True)                      # (C, 1)
        spq = jnp.dot(w_spwq_t_ref[...], mean_x,
                      preferred_element_type=jnp.float32) + b_spwq_ref[...]     # (Ch, 1)
        m2 = jnp.max(spq, axis=0, keepdims=True)
        e2 = jnp.exp(spq - m2)
        sq = e2 / jnp.sum(e2, axis=0, keepdims=True)                      # (Ch, 1)

        # sp_wz = x^T (Wv_s^T sq) + <b_v_s, sq>   (never materialize spwv).
        w_eff = jnp.dot(w_spwv_ref[...], sq,
                        preferred_element_type=jnp.float32)               # (C, 1)
        bias_eff = jnp.sum(b_spwv_ref[...] * sq, axis=0, keepdims=True)   # (1, 1)
        sp_wz = jnp.sum(xb * w_eff, axis=0, keepdims=True) + bias_eff     # (1, HW)
        sw = jax.nn.sigmoid(sp_wz)                                        # (1, HW)

        # -------- fused epilogue: sw*x + x + cw*x + x = x*(sw + cw + 2) --------
        out_ref[b] = xb * (sw + cw + 2.0)


def _pick_tb(B, C, HW):
    """Batch elements per grid step.

    Prefer >= 2 parallel grid steps (v7x has 2 TensorCores), batch the rest of
    B inside one step to amortize the ~0.35us/step pipeline overhead, and keep
    the per-step x block under ~2 MiB of VMEM.
    """
    target_steps = 2 if B >= 2 else 1
    tb = max(1, B // target_steps)
    while tb > 1 and (B % tb != 0 or tb * C * HW * 4 > (2 << 20)):
        tb -= 1
    return tb


@jax.jit
def parallel_attention_pallas(x_nchw, params):
    """x_nchw: (B, C, H, W) float32.  Returns (B, C, H, W)."""
    B, C, H, W = x_nchw.shape
    HW = H * W
    Ch = C // 2

    # NCHW -> (B, C, HW) is a free, contiguous reshape (no transpose kernels).
    x3 = x_nchw.reshape(B, C, HW)

    # Kernel-layout weights (tiny arrays; transposes fuse away under jit).
    weight_args = (
        params["w_chwq"],            # (C, 1)
        params["w_chwv"].T,          # (Ch, C)
        params["b_chwv"].T,          # (Ch, 1)
        params["w_chwz"].T,          # (C, Ch)
        params["b_chwz"].T,          # (C, 1)
        params["gamma"].T,           # (C, 1)
        params["beta"].T,            # (C, 1)
        params["w_spwq"].T,          # (Ch, C)
        params["b_spwq"].T,          # (Ch, 1)
        params["w_spwv"],            # (C, Ch)
        params["b_spwv"].T,          # (Ch, 1)
    )

    TB = _pick_tb(B, C, HW)
    grid = (B // TB,)

    in_specs = [pl.BlockSpec((TB, C, HW), lambda i: (i, 0, 0))]
    in_specs += [pl.BlockSpec(w.shape, lambda i: (0, 0)) for w in weight_args]

    out = pl.pallas_call(
        functools.partial(_psa_kernel, tb=TB),
        out_shape=jax.ShapeDtypeStruct((B, C, HW), jnp.float32),
        grid_spec=pltpu.PrefetchScalarGridSpec(
            num_scalar_prefetch=0,
            grid=grid,
            in_specs=in_specs,
            out_specs=pl.BlockSpec((TB, C, HW), lambda i: (i, 0, 0)),
        ),
        input_output_aliases={0: 0},  # x is dead after the call
        compiler_params=pltpu.CompilerParams(
            dimension_semantics=("parallel",)),
    )(x3, *weight_args)

    # (B, C, HW) -> NCHW is again a free reshape.
    return out.reshape(B, C, H, W)


def init_params(key, C):
    """Deterministic synthetic parameters.

    Conv weights: kaiming-normal fan_in (std = sqrt(2 / fan_in)), matching the
    module's init_weights().  Conv biases: small deterministic uniforms.
    LayerNorm: gamma=1, beta=0 (torch default).
    All 1x1 conv weights are stored as (Cin, Cout) matmul matrices.
    """
    Ch = C // 2
    ks = jax.random.split(key, 10)

    def kaiming(k, cin, cout):
        std = np.sqrt(2.0 / cin)
        return jax.random.normal(k, (cin, cout), jnp.float32) * std

    def bias(k, cout):
        bound = 1.0 / np.sqrt(C)
        return jax.random.uniform(k, (1, cout), jnp.float32, -bound, bound)

    return {
        "w_chwv": kaiming(ks[0], C, Ch),  "b_chwv": bias(ks[1], Ch),
        "w_chwq": kaiming(ks[2], C, 1),   "b_chwq": bias(ks[3], 1),
        "w_chwz": kaiming(ks[4], Ch, C),  "b_chwz": bias(ks[5], C),
        "gamma": jnp.ones((1, C), jnp.float32),
        "beta": jnp.zeros((1, C), jnp.float32),
        "w_spwv": kaiming(ks[6], C, Ch),  "b_spwv": bias(ks[7], Ch),
        "w_spwq": kaiming(ks[8], C, Ch),  "b_spwq": bias(ks[9], Ch),
    }


def parallel_attention_ref(x_nchw, params):
    """Pure-JAX reference mirroring the PyTorch forward, for verification."""
    B, C, H, W = x_nchw.shape
    HW = H * W
    x = jnp.transpose(x_nchw, (0, 2, 3, 1)).reshape(B, HW, C)  # (B, HW, C)

    chwv = jnp.einsum("bsc,cd->bsd", x, params["w_chwv"]) + params["b_chwv"]
    chwq = jnp.einsum("bsc,cd->bsd", x, params["w_chwq"]) + params["b_chwq"]
    q = jax.nn.softmax(chwq, axis=1)                                 # (B, HW, 1)
    chwz = jnp.sum(chwv * q, axis=1, keepdims=True)                  # (B, 1, C/2)
    z = jnp.einsum("bsc,cd->bsd", chwz, params["w_chwz"]) + params["b_chwz"]
    mu = jnp.mean(z, axis=-1, keepdims=True)
    var = jnp.mean((z - mu) ** 2, axis=-1, keepdims=True)
    ln = (z - mu) / jnp.sqrt(var + 1e-5) * params["gamma"] + params["beta"]
    ch_w = jax.nn.sigmoid(ln)                                        # (B, 1, C)
    channel_out = ch_w * x + x

    spwv = jnp.einsum("bsc,cd->bsd", x, params["w_spwv"]) + params["b_spwv"]
    spwq = jnp.einsum("bsc,cd->bsd", x, params["w_spwq"]) + params["b_spwq"]
    sq = jax.nn.softmax(jnp.mean(spwq, axis=1, keepdims=True), axis=-1)  # (B,1,C/2)
    sp_wz = jnp.sum(spwv * sq, axis=-1, keepdims=True)               # (B, HW, 1)
    sp_w = jax.nn.sigmoid(sp_wz)
    spatial_out = sp_w * x + x

    out = spatial_out + channel_out
    return jnp.transpose(out.reshape(B, H, W, C), (0, 3, 1, 2))


if __name__ == "__main__":
    key = jax.random.PRNGKey(0)
    k_x, k_p = jax.random.split(key)

    B, C, H, W = 2, 128, 8, 8
    x = jax.random.normal(k_x, (B, C, H, W), jnp.float32)
    params = init_params(k_p, C)

    out = parallel_attention_pallas(x, params)
    out = jax.block_until_ready(out)

    ref = jax.block_until_ready(parallel_attention_ref(x, params))
    np.testing.assert_allclose(np.asarray(out), np.asarray(ref),
                               rtol=1e-4, atol=1e-4)
    print("KERNEL_OK")
</pallas_src>

<mosaic_0001>
module attributes {stable_mosaic.version = 11 : i64} {
  func.func @_psa_kernel(%arg0: i32, %arg1: memref<1x128x64xf32, #tpu.memory_space<vmem>>, %arg2: memref<128x1xf32, #tpu.memory_space<vmem>>, %arg3: memref<64x128xf32, #tpu.memory_space<vmem>>, %arg4: memref<64x1xf32, #tpu.memory_space<vmem>>, %arg5: memref<128x64xf32, #tpu.memory_space<vmem>>, %arg6: memref<128x1xf32, #tpu.memory_space<vmem>>, %arg7: memref<128x1xf32, #tpu.memory_space<vmem>>, %arg8: memref<128x1xf32, #tpu.memory_space<vmem>>, %arg9: memref<64x128xf32, #tpu.memory_space<vmem>>, %arg10: memref<64x1xf32, #tpu.memory_space<vmem>>, %arg11: memref<128x64xf32, #tpu.memory_space<vmem>>, %arg12: memref<64x1xf32, #tpu.memory_space<vmem>>, %arg13: memref<1x128x64xf32, #tpu.memory_space<vmem>>) attributes {dimension_semantics = [#tpu.dimension_semantics<parallel>], iteration_bounds = array<i64: 2>, scalar_prefetch = 0 : i64, scratch_operands = 0 : i64, tpu.core_type = #tpu.core_type<tc>, window_params = [{transform_indices = @transform_0, window_bounds = array<i64: 1, 128, 64>}, {pipeline_mode = #tpu.pipeline_mode<synchronous>, transform_indices = @transform_1, window_bounds = array<i64: 128, 1>}, {pipeline_mode = #tpu.pipeline_mode<synchronous>, transform_indices = @transform_2, window_bounds = array<i64: 64, 128>}, {pipeline_mode = #tpu.pipeline_mode<synchronous>, transform_indices = @transform_3, window_bounds = array<i64: 64, 1>}, {pipeline_mode = #tpu.pipeline_mode<synchronous>, transform_indices = @transform_4, window_bounds = array<i64: 128, 64>}, {pipeline_mode = #tpu.pipeline_mode<synchronous>, transform_indices = @transform_5, window_bounds = array<i64: 128, 1>}, {pipeline_mode = #tpu.pipeline_mode<synchronous>, transform_indices = @transform_6, window_bounds = array<i64: 128, 1>}, {pipeline_mode = #tpu.pipeline_mode<synchronous>, transform_indices = @transform_7, window_bounds = array<i64: 128, 1>}, {pipeline_mode = #tpu.pipeline_mode<synchronous>, transform_indices = @transform_8, window_bounds = array<i64: 64, 128>}, {pipeline_mode = #tpu.pipeline_mode<synchronous>, transform_indices = @transform_9, window_bounds = array<i64: 64, 1>}, {pipeline_mode = #tpu.pipeline_mode<synchronous>, transform_indices = @transform_10, window_bounds = array<i64: 128, 64>}, {pipeline_mode = #tpu.pipeline_mode<synchronous>, transform_indices = @transform_11, window_bounds = array<i64: 64, 1>}, {transform_indices = @transform_12, window_bounds = array<i64: 1, 128, 64>}]} {
    %c0 = arith.constant 0 : index
    %c0_0 = arith.constant 0 : index
    %c0_1 = arith.constant 0 : index
    %0 = vector.load %arg1[%c0, %c0_0, %c0_1] : memref<1x128x64xf32, #tpu.memory_space<vmem>>, vector<1x128x64xf32>
    %1 = vector.shape_cast %0 : vector<1x128x64xf32> to vector<128x64xf32>
    %c0_2 = arith.constant 0 : index
    %c0_3 = arith.constant 0 : index
    %2 = vector.load %arg2[%c0_2, %c0_3] : memref<128x1xf32, #tpu.memory_space<vmem>>, vector<128x1xf32>
    %3 = vector.broadcast %2 : vector<128x1xf32> to vector<128x64xf32>
    %4 = arith.mulf %1, %3 : vector<128x64xf32>
    %cst = arith.constant dense<0.000000e+00> : vector<64xf32>
    %5 = vector.multi_reduction <add>, %4, %cst [0] : vector<128x64xf32> to vector<64xf32>
    %6 = vector.shape_cast %5 : vector<64xf32> to vector<1x64xf32>
    %cst_4 = arith.constant dense<0xFF800000> : vector<1xf32>
    %7 = vector.multi_reduction <maximumf>, %6, %cst_4 [1] : vector<1x64xf32> to vector<1xf32>
    %8 = vector.shape_cast %7 : vector<1xf32> to vector<1x1xf32>
    %9 = vector.broadcast %8 : vector<1x1xf32> to vector<1x64xf32>
    %10 = arith.subf %6, %9 : vector<1x64xf32>
    %11 = math.exp %10 : vector<1x64xf32>
    %cst_5 = arith.constant dense<0.000000e+00> : vector<1xf32>
    %12 = vector.multi_reduction <add>, %11, %cst_5 [1] : vector<1x64xf32> to vector<1xf32>
    %13 = vector.shape_cast %12 : vector<1xf32> to vector<1x1xf32>
    %14 = vector.broadcast %13 : vector<1x1xf32> to vector<1x64xf32>
    %15 = arith.divf %11, %14 : vector<1x64xf32>
    %16 = vector.broadcast %15 : vector<1x64xf32> to vector<128x64xf32>
    %17 = arith.mulf %1, %16 : vector<128x64xf32>
    %cst_6 = arith.constant dense<0.000000e+00> : vector<128xf32>
    %18 = vector.multi_reduction <add>, %17, %cst_6 [1] : vector<128x64xf32> to vector<128xf32>
    %19 = vector.shape_cast %18 : vector<128xf32> to vector<128x1xf32>
    %c0_7 = arith.constant 0 : index
    %c0_8 = arith.constant 0 : index
    %20 = vector.load %arg3[%c0_7, %c0_8] : memref<64x128xf32, #tpu.memory_space<vmem>>, vector<64x128xf32>
    %cst_9 = arith.constant dense<0.000000e+00> : vector<64x1xf32>
    %21 = tpu.matmul %20, %19, %cst_9 {dimension_numbers = #tpu.dot_dimension_numbers<[1], [0], [0], [1], [0, 0, 1, 1], [], []>} : vector<64x128xf32>, vector<128x1xf32>, vector<64x1xf32> -> vector<64x1xf32>
    %c0_10 = arith.constant 0 : index
    %c0_11 = arith.constant 0 : index
    %22 = vector.load %arg4[%c0_10, %c0_11] : memref<64x1xf32, #tpu.memory_space<vmem>>, vector<64x1xf32>
    %23 = arith.addf %21, %22 : vector<64x1xf32>
    %c0_12 = arith.constant 0 : index
    %c0_13 = arith.constant 0 : index
    %24 = vector.load %arg5[%c0_12, %c0_13] : memref<128x64xf32, #tpu.memory_space<vmem>>, vector<128x64xf32>
    %cst_14 = arith.constant dense<0.000000e+00> : vector<128x1xf32>
    %25 = tpu.matmul %24, %23, %cst_14 {dimension_numbers = #tpu.dot_dimension_numbers<[1], [0], [0], [1], [0, 0, 1, 1], [], []>} : vector<128x64xf32>, vector<64x1xf32>, vector<128x1xf32> -> vector<128x1xf32>
    %c0_15 = arith.constant 0 : index
    %c0_16 = arith.constant 0 : index
    %26 = vector.load %arg6[%c0_15, %c0_16] : memref<128x1xf32, #tpu.memory_space<vmem>>, vector<128x1xf32>
    %27 = arith.addf %25, %26 : vector<128x1xf32>
    %cst_17 = arith.constant dense<0.000000e+00> : vector<1xf32>
    %28 = vector.multi_reduction <add>, %27, %cst_17 [0] : vector<128x1xf32> to vector<1xf32>
    %29 = vector.shape_cast %28 : vector<1xf32> to vector<1x1xf32>
    %cst_18 = arith.constant 1.280000e+02 : f32
    %30 = vector.broadcast %cst_18 : f32 to vector<1x1xf32>
    %31 = arith.divf %29, %30 : vector<1x1xf32>
    %32 = vector.broadcast %31 : vector<1x1xf32> to vector<128x1xf32>
    %33 = arith.subf %27, %32 : vector<128x1xf32>
    %34 = arith.mulf %33, %33 : vector<128x1xf32>
    %cst_19 = arith.constant dense<0.000000e+00> : vector<1xf32>
    %35 = vector.multi_reduction <add>, %34, %cst_19 [0] : vector<128x1xf32> to vector<1xf32>
    %36 = vector.shape_cast %35 : vector<1xf32> to vector<1x1xf32>
    %cst_20 = arith.constant 1.280000e+02 : f32
    %37 = vector.broadcast %cst_20 : f32 to vector<1x1xf32>
    %38 = arith.divf %36, %37 : vector<1x1xf32>
    %cst_21 = arith.constant 9.99999974E-6 : f32
    %39 = vector.broadcast %cst_21 : f32 to vector<1x1xf32>
    %40 = arith.addf %38, %39 : vector<1x1xf32>
    %41 = math.rsqrt %40 : vector<1x1xf32>
    %42 = vector.broadcast %41 : vector<1x1xf32> to vector<128x1xf32>
    %43 = arith.mulf %33, %42 : vector<128x1xf32>
    %c0_22 = arith.constant 0 : index
    %c0_23 = arith.constant 0 : index
    %44 = vector.load %arg7[%c0_22, %c0_23] : memref<128x1xf32, #tpu.memory_space<vmem>>, vector<128x1xf32>
    %45 = arith.mulf %43, %44 : vector<128x1xf32>
    %c0_24 = arith.constant 0 : index
    %c0_25 = arith.constant 0 : index
    %46 = vector.load %arg8[%c0_24, %c0_25] : memref<128x1xf32, #tpu.memory_space<vmem>>, vector<128x1xf32>
    %47 = arith.addf %45, %46 : vector<128x1xf32>
    %48 = arith.negf %47 : vector<128x1xf32>
    %49 = math.exp %48 : vector<128x1xf32>
    %cst_26 = arith.constant 1.000000e+00 : f32
    %50 = vector.broadcast %cst_26 : f32 to vector<128x1xf32>
    %51 = arith.addf %50, %49 : vector<128x1xf32>
    %52 = arith.divf %50, %51 : vector<128x1xf32>
    %cst_27 = arith.constant dense<0.000000e+00> : vector<128xf32>
    %53 = vector.multi_reduction <add>, %1, %cst_27 [1] : vector<128x64xf32> to vector<128xf32>
    %54 = vector.shape_cast %53 : vector<128xf32> to vector<128x1xf32>
    %cst_28 = arith.constant 6.400000e+01 : f32
    %55 = vector.broadcast %cst_28 : f32 to vector<128x1xf32>
    %56 = arith.divf %54, %55 : vector<128x1xf32>
    %c0_29 = arith.constant 0 : index
    %c0_30 = arith.constant 0 : index
    %57 = vector.load %arg9[%c0_29, %c0_30] : memref<64x128xf32, #tpu.memory_space<vmem>>, vector<64x128xf32>
    %cst_31 = arith.constant dense<0.000000e+00> : vector<64x1xf32>
    %58 = tpu.matmul %57, %56, %cst_31 {dimension_numbers = #tpu.dot_dimension_numbers<[1], [0], [0], [1], [0, 0, 1, 1], [], []>} : vector<64x128xf32>, vector<128x1xf32>, vector<64x1xf32> -> vector<64x1xf32>
    %c0_32 = arith.constant 0 : index
    %c0_33 = arith.constant 0 : index
    %59 = vector.load %arg10[%c0_32, %c0_33] : memref<64x1xf32, #tpu.memory_space<vmem>>, vector<64x1xf32>
    %60 = arith.addf %58, %59 : vector<64x1xf32>
    %cst_34 = arith.constant dense<0xFF800000> : vector<1xf32>
    %61 = vector.multi_reduction <maximumf>, %60, %cst_34 [0] : vector<64x1xf32> to vector<1xf32>
    %62 = vector.shape_cast %61 : vector<1xf32> to vector<1x1xf32>
    %63 = vector.broadcast %62 : vector<1x1xf32> to vector<64x1xf32>
    %64 = arith.subf %60, %63 : vector<64x1xf32>
    %65 = math.exp %64 : vector<64x1xf32>
    %cst_35 = arith.constant dense<0.000000e+00> : vector<1xf32>
    %66 = vector.multi_reduction <add>, %65, %cst_35 [0] : vector<64x1xf32> to vector<1xf32>
    %67 = vector.shape_cast %66 : vector<1xf32> to vector<1x1xf32>
    %68 = vector.broadcast %67 : vector<1x1xf32> to vector<64x1xf32>
    %69 = arith.divf %65, %68 : vector<64x1xf32>
    %c0_36 = arith.constant 0 : index
    %c0_37 = arith.constant 0 : index
    %70 = vector.load %arg11[%c0_36, %c0_37] : memref<128x64xf32, #tpu.memory_space<vmem>>, vector<128x64xf32>
    %cst_38 = arith.constant dense<0.000000e+00> : vector<128x1xf32>
    %71 = tpu.matmul %70, %69, %cst_38 {dimension_numbers = #tpu.dot_dimension_numbers<[1], [0], [0], [1], [0, 0, 1, 1], [], []>} : vector<128x64xf32>, vector<64x1xf32>, vector<128x1xf32> -> vector<128x1xf32>
    %c0_39 = arith.constant 0 : index
    %c0_40 = arith.constant 0 : index
    %72 = vector.load %arg12[%c0_39, %c0_40] : memref<64x1xf32, #tpu.memory_space<vmem>>, vector<64x1xf32>
    %73 = arith.mulf %72, %69 : vector<64x1xf32>
    %cst_41 = arith.constant dense<0.000000e+00> : vector<1xf32>
    %74 = vector.multi_reduction <add>, %73, %cst_41 [0] : vector<64x1xf32> to vector<1xf32>
    %75 = vector.shape_cast %74 : vector<1xf32> to vector<1x1xf32>
    %76 = vector.broadcast %71 : vector<128x1xf32> to vector<128x64xf32>
    %77 = arith.mulf %1, %76 : vector<128x64xf32>
    %cst_42 = arith.constant dense<0.000000e+00> : vector<64xf32>
    %78 = vector.multi_reduction <add>, %77, %cst_42 [0] : vector<128x64xf32> to vector<64xf32>
    %79 = vector.shape_cast %78 : vector<64xf32> to vector<1x64xf32>
    %80 = vector.broadcast %75 : vector<1x1xf32> to vector<1x64xf32>
    %81 = arith.addf %79, %80 : vector<1x64xf32>
    %82 = arith.negf %81 : vector<1x64xf32>
    %83 = math.exp %82 : vector<1x64xf32>
    %cst_43 = arith.constant 1.000000e+00 : f32
    %84 = vector.broadcast %cst_43 : f32 to vector<1x64xf32>
    %85 = arith.addf %84, %83 : vector<1x64xf32>
    %86 = arith.divf %84, %85 : vector<1x64xf32>
    %87 = vector.broadcast %86 : vector<1x64xf32> to vector<128x64xf32>
    %88 = vector.broadcast %52 : vector<128x1xf32> to vector<128x64xf32>
    %89 = arith.addf %87, %88 : vector<128x64xf32>
    %cst_44 = arith.constant 2.000000e+00 : f32
    %90 = vector.broadcast %cst_44 : f32 to vector<128x64xf32>
    %91 = arith.addf %89, %90 : vector<128x64xf32>
    %92 = arith.mulf %1, %91 : vector<128x64xf32>
    %c0_45 = arith.constant 0 : index
    %c0_46 = arith.constant 0 : index
    %c0_47 = arith.constant 0 : index
    %93 = vector.load %arg13[%c0_45, %c0_46, %c0_47] : memref<1x128x64xf32, #tpu.memory_space<vmem>>, vector<1x128x64xf32>
    %94 = vector.shape_cast %93 : vector<1x128x64xf32> to vector<128x64xf32>
    %95 = vector.shape_cast %92 : vector<128x64xf32> to vector<1x128x64xf32>
    tpu.vector_store %arg13[%c0_45, %c0_46, %c0_47], %95 {strides = array<i32>} : memref<1x128x64xf32, #tpu.memory_space<vmem>>, vector<1x128x64xf32>,
    return
  }
  func.func @transform_0(%arg0: i32) -> (i32, i32, i32) {
    %c0_i32 = arith.constant 0 : i32
    %c0_i32_0 = arith.constant 0 : i32
    %c0_i32_1 = arith.constant 0 : i32
    return %arg0, %c0_i32, %c0_i32_0 : i32, i32, i32
  }
  func.func @transform_1(%arg0: i32) -> (i32, i32) {
    %c0_i32 = arith.constant 0 : i32
    %c0_i32_0 = arith.constant 0 : i32
    %c0_i32_1 = arith.constant 0 : i32
    return %c0_i32, %c0_i32_0 : i32, i32
  }
  func.func @transform_2(%arg0: i32) -> (i32, i32) {
    %c0_i32 = arith.constant 0 : i32
    %c0_i32_0 = arith.constant 0 : i32
    %c0_i32_1 = arith.constant 0 : i32
    return %c0_i32, %c0_i32_0 : i32, i32
  }
  func.func @transform_3(%arg0: i32) -> (i32, i32) {
    %c0_i32 = arith.constant 0 : i32
    %c0_i32_0 = arith.constant 0 : i32
    %c0_i32_1 = arith.constant 0 : i32
    return %c0_i32, %c0_i32_0 : i32, i32
  }
  func.func @transform_4(%arg0: i32) -> (i32, i32) {
    %c0_i32 = arith.constant 0 : i32
    %c0_i32_0 = arith.constant 0 : i32
    %c0_i32_1 = arith.constant 0 : i32
    return %c0_i32, %c0_i32_0 : i32, i32
  }
  func.func @transform_5(%arg0: i32) -> (i32, i32) {
    %c0_i32 = arith.constant 0 : i32
    %c0_i32_0 = arith.constant 0 : i32
    %c0_i32_1 = arith.constant 0 : i32
    return %c0_i32, %c0_i32_0 : i32, i32
  }
  func.func @transform_6(%arg0: i32) -> (i32, i32) {
    %c0_i32 = arith.constant 0 : i32
    %c0_i32_0 = arith.constant 0 : i32
    %c0_i32_1 = arith.constant 0 : i32
    return %c0_i32, %c0_i32_0 : i32, i32
  }
  func.func @transform_7(%arg0: i32) -> (i32, i32) {
    %c0_i32 = arith.constant 0 : i32
    %c0_i32_0 = arith.constant 0 : i32
    %c0_i32_1 = arith.constant 0 : i32
    return %c0_i32, %c0_i32_0 : i32, i32
  }
  func.func @transform_8(%arg0: i32) -> (i32, i32) {
    %c0_i32 = arith.constant 0 : i32
    %c0_i32_0 = arith.constant 0 : i32
    %c0_i32_1 = arith.constant 0 : i32
    return %c0_i32, %c0_i32_0 : i32, i32
  }
  func.func @transform_9(%arg0: i32) -> (i32, i32) {
    %c0_i32 = arith.constant 0 : i32
    %c0_i32_0 = arith.constant 0 : i32
    %c0_i32_1 = arith.constant 0 : i32
    return %c0_i32, %c0_i32_0 : i32, i32
  }
  func.func @transform_10(%arg0: i32) -> (i32, i32) {
    %c0_i32 = arith.constant 0 : i32
    %c0_i32_0 = arith.constant 0 : i32
    %c0_i32_1 = arith.constant 0 : i32
    return %c0_i32, %c0_i32_0 : i32, i32
  }
  func.func @transform_11(%arg0: i32) -> (i32, i32) {
    %c0_i32 = arith.constant 0 : i32
    %c0_i32_0 = arith.constant 0 : i32
    %c0_i32_1 = arith.constant 0 : i32
    return %c0_i32, %c0_i32_0 : i32, i32
  }
  func.func @transform_12(%arg0: i32) -> (i32, i32, i32) {
    %c0_i32 = arith.constant 0 : i32
    %c0_i32_0 = arith.constant 0 : i32
    %c0_i32_1 = arith.constant 0 : i32
    return %arg0, %c0_i32, %c0_i32_0 : i32, i32, i32
  }
}

</mosaic_0001>

<llo_original>
// kernel: parallel_attention_pallas.1
$region0: #{parallel_attention_pallas.1}
  #allocation0 [shape = 'u32[]', space=smem, size = 0x4, offset = 0x4, fixed_abs, tag = 'smem constant byte address 0x4 - core index']
  #allocation1 [shape = 'u32[144,128]{1,0:T(1,128)}', space=vmem, size = 0x12000, scoped, tag = 'internal scratch']
  %s0 = inlined_call_operand.vmem [shape: f32[2,128,64], index: 0, kind: input, shape index: {}, may-alias: {0,12}]
  %s1 = inlined_call_operand.vmem [shape: f32[128,1], index: 1, kind: input, shape index: {}]
  %s2 = inlined_call_operand.vmem [shape: f32[64,128], index: 2, kind: input, shape index: {}]
  %s3 = inlined_call_operand.vmem [shape: f32[64,1], index: 3, kind: input, shape index: {}]
  %s4 = inlined_call_operand.vmem [shape: f32[128,64], index: 4, kind: input, shape index: {}]
  %s5 = inlined_call_operand.vmem [shape: f32[128,1], index: 5, kind: input, shape index: {}]
  %s6 = inlined_call_operand.vmem [shape: f32[128,1], index: 6, kind: input, shape index: {}]
  %s7 = inlined_call_operand.vmem [shape: f32[128,1], index: 7, kind: input, shape index: {}]
  %s8 = inlined_call_operand.vmem [shape: f32[64,128], index: 8, kind: input, shape index: {}]
  %s9 = inlined_call_operand.vmem [shape: f32[64,1], index: 9, kind: input, shape index: {}]
  %s10 = inlined_call_operand.vmem [shape: f32[128,64], index: 10, kind: input, shape index: {}]
  %s11 = inlined_call_operand.vmem [shape: f32[64,1], index: 11, kind: input, shape index: {}]
  %s12 = inlined_call_operand.vmem [shape: f32[2,128,64], index: 12, kind: output, shape index: {}, may-alias: {0,12}]
  %s13 = sld [smem:[#allocation0]]
  $region81: #{parallel_attention_pallas.1} parent=0
    _
  %s15 = ssub.s32 1, %s13
  %s16 = scalar_select 0, %s15, %s13
  loop: start=0, step=1, limit=4
  $region2: #{parallel_attention_pallas.1} parent=0 // loop_pre_header
    _
  $region3: #{parallel_attention_pallas.1} parent=0 // loop_header
    %s18 = sphi 0, %s22
    %p19 = scmp.ge.s32.totalorder %s18, 4
    %s28 = sphi 0, %s30
    %s31 = sphi 0, %s28
    %s32 = sphi 0, %s31
    %s48 = sphi 0, %s32
    %s52 = sphi 0, %s52
    %s54 = sphi 0, %s52
    %s55 = sphi 0, %s54
    %s69 = sphi 0, %s55
    %s73 = sphi 0, %s73
    %s75 = sphi 0, %s73
    %s76 = sphi 0, %s75
    %s90 = sphi 0, %s76
    %s94 = sphi 0, %s94
    %s96 = sphi 0, %s94
    %s97 = sphi 0, %s96
    %s111 = sphi 0, %s97
    %s115 = sphi 0, %s115
    %s117 = sphi 0, %s115
    %s118 = sphi 0, %s117
    %s132 = sphi 0, %s118
    %s136 = sphi 0, %s136
    %s138 = sphi 0, %s136
    %s139 = sphi 0, %s138
    %s153 = sphi 0, %s139
    %s157 = sphi 0, %s157
    %s159 = sphi 0, %s157
    %s160 = sphi 0, %s159
    %s174 = sphi 0, %s160
    %s178 = sphi 0, %s178
    %s180 = sphi 0, %s178
    %s181 = sphi 0, %s180
    %s195 = sphi 0, %s181
    %s199 = sphi 0, %s199
    %s201 = sphi 0, %s199
    %s202 = sphi 0, %s201
    %s216 = sphi 0, %s202
    %s220 = sphi 0, %s220
    %s222 = sphi 0, %s220
    %s223 = sphi 0, %s222
    %s237 = sphi 0, %s223
    %s241 = sphi 0, %s241
    %s243 = sphi 0, %s241
    %s244 = sphi 0, %s243
    %s258 = sphi 0, %s244
    %s262 = sphi 0, %s262
    %s264 = sphi 0, %s262
    %s265 = sphi 0, %s264
    %s279 = sphi 0, %s265
    %s285 = sphi 0, %s287
    %s288 = sphi 0, %s285
    %s289 = sphi 0, %s288
    %s305 = sphi 0, %s289
  $region4: #{parallel_attention_pallas.1} parent=0 // loop_header_branch
    %21 = sbr.rel (%p19) target = $region8
  $region5: #{parallel_attention_pallas.1} parent=0 // loop_body
    %s23 = ssub.s32 %s18, 1
    %s24 = ssub.s32 %s18, 2
    %s25 = sadd.s32 %s18, 1
    %s26 = ssub.s32 %s18, %s25
    %p27 = scmp.eq.s32.totalorder %s26, 0
    %s29 = sadd.s32 %s28, 1
    %s30 = scalar_select %p27, %s28, %s29
    %p33 = pneg %p27
    %p34 = scmp.eq.s32.totalorder %s18, 1
    %p35 = por %p33, %p34
    %p36 = scmp.ne.s32.totalorder %s28, %s31
    %p37 = scmp.eq.s32.totalorder %s18, 0
    %p38 = por %p36, %p37
    %p39 = scmp.ne.s32.totalorder %s28, %s31
    %p40 = scmp.eq.s32.totalorder %s23, 1
    %p41 = por %p39, %p40
    %p42 = scmp.ne.s32.totalorder %s31, %s32
    %p43 = scmp.eq.s32.totalorder %s23, 0
    %p44 = por %p42, %p43
    %p45 = scmp.ne.s32.totalorder %s31, %s32
    %p46 = scmp.eq.s32.totalorder %s24, 1
    %p47 = por %p45, %p46
    %p49 = scmp.ne.s32.totalorder %s32, %s48
    %p50 = scmp.eq.s32.totalorder %s24, 0
    %p51 = por %p49, %p50
    %s53 = sadd.s32 %s52, 1
    %p56 = scmp.eq.s32.totalorder %s18, 1
    %p57 = scmp.ne.s32.totalorder %s52, %s54
    %p58 = scmp.eq.s32.totalorder %s18, 0
    %p59 = por %p57, %p58
    %p60 = scmp.ne.s32.totalorder %s52, %s54
    %p61 = scmp.eq.s32.totalorder %s23, 1
    %p62 = por %p60, %p61
    %p63 = scmp.ne.s32.totalorder %s54, %s55
    %p64 = scmp.eq.s32.totalorder %s23, 0
    %p65 = por %p63, %p64
    %p66 = scmp.ne.s32.totalorder %s54, %s55
    %p67 = scmp.eq.s32.totalorder %s24, 1
    %p68 = por %p66, %p67
    %p70 = scmp.ne.s32.totalorder %s55, %s69
    %p71 = scmp.eq.s32.totalorder %s24, 0
    %p72 = por %p70, %p71
    %s74 = sadd.s32 %s73, 1
    %p77 = scmp.eq.s32.totalorder %s18, 1
    %p78 = scmp.ne.s32.totalorder %s73, %s75
    %p79 = scmp.eq.s32.totalorder %s18, 0
    %p80 = por %p78, %p79
    %p81 = scmp.ne.s32.totalorder %s73, %s75
    %p82 = scmp.eq.s32.totalorder %s23, 1
    %p83 = por %p81, %p82
    %p84 = scmp.ne.s32.totalorder %s75, %s76
    %p85 = scmp.eq.s32.totalorder %s23, 0
    %p86 = por %p84, %p85
    %p87 = scmp.ne.s32.totalorder %s75, %s76
    %p88 = scmp.eq.s32.totalorder %s24, 1
    %p89 = por %p87, %p88
    %p91 = scmp.ne.s32.totalorder %s76, %s90
    %p92 = scmp.eq.s32.totalorder %s24, 0
    %p93 = por %p91, %p92
    %s95 = sadd.s32 %s94, 1
    %p98 = scmp.eq.s32.totalorder %s18, 1
    %p99 = scmp.ne.s32.totalorder %s94, %s96
    %p100 = scmp.eq.s32.totalorder %s18, 0
    %p101 = por %p99, %p100
    %p102 = scmp.ne.s32.totalorder %s94, %s96
    %p103 = scmp.eq.s32.totalorder %s23, 1
    %p104 = por %p102, %p103
    %p105 = scmp.ne.s32.totalorder %s96, %s97
    %p106 = scmp.eq.s32.totalorder %s23, 0
    %p107 = por %p105, %p106
    %p108 = scmp.ne.s32.totalorder %s96, %s97
    %p109 = scmp.eq.s32.totalorder %s24, 1
    %p110 = por %p108, %p109
    %p112 = scmp.ne.s32.totalorder %s97, %s111
    %p113 = scmp.eq.s32.totalorder %s24, 0
    %p114 = por %p112, %p113
    %s116 = sadd.s32 %s115, 1
    %p119 = scmp.eq.s32.totalorder %s18, 1
    %p120 = scmp.ne.s32.totalorder %s115, %s117
    %p121 = scmp.eq.s32.totalorder %s18, 0
    %p122 = por %p120, %p121
    %p123 = scmp.ne.s32.totalorder %s115, %s117
    %p124 = scmp.eq.s32.totalorder %s23, 1
    %p125 = por %p123, %p124
    %p126 = scmp.ne.s32.totalorder %s117, %s118
    %p127 = scmp.eq.s32.totalorder %s23, 0
    %p128 = por %p126, %p127
    %p129 = scmp.ne.s32.totalorder %s117, %s118
    %p130 = scmp.eq.s32.totalorder %s24, 1
    %p131 = por %p129, %p130
    %p133 = scmp.ne.s32.totalorder %s118, %s132
    %p134 = scmp.eq.s32.totalorder %s24, 0
    %p135 = por %p133, %p134
    %s137 = sadd.s32 %s136, 1
    %p140 = scmp.eq.s32.totalorder %s18, 1
    %p141 = scmp.ne.s32.totalorder %s136, %s138
    %p142 = scmp.eq.s32.totalorder %s18, 0
    %p143 = por %p141, %p142
    %p144 = scmp.ne.s32.totalorder %s136, %s138
    %p145 = scmp.eq.s32.totalorder %s23, 1
    %p146 = por %p144, %p145
    %p147 = scmp.ne.s32.totalorder %s138, %s139
    %p148 = scmp.eq.s32.totalorder %s23, 0
    %p149 = por %p147, %p148
    %p150 = scmp.ne.s32.totalorder %s138, %s139
    %p151 = scmp.eq.s32.totalorder %s24, 1
    %p152 = por %p150, %p151
    %p154 = scmp.ne.s32.totalorder %s139, %s153
    %p155 = scmp.eq.s32.totalorder %s24, 0
    %p156 = por %p154, %p155
    %s158 = sadd.s32 %s157, 1
    %p161 = scmp.eq.s32.totalorder %s18, 1
    %p162 = scmp.ne.s32.totalorder %s157, %s159
    %p163 = scmp.eq.s32.totalorder %s18, 0
    %p164 = por %p162, %p163
    %p165 = scmp.ne.s32.totalorder %s157, %s159
    %p166 = scmp.eq.s32.totalorder %s23, 1
    %p167 = por %p165, %p166
    %p168 = scmp.ne.s32.totalorder %s159, %s160
    %p169 = scmp.eq.s32.totalorder %s23, 0
    %p170 = por %p168, %p169
    %p171 = scmp.ne.s32.totalorder %s159, %s160
    %p172 = scmp.eq.s32.totalorder %s24, 1
    %p173 = por %p171, %p172
    %p175 = scmp.ne.s32.totalorder %s160, %s174
    %p176 = scmp.eq.s32.totalorder %s24, 0
    %p177 = por %p175, %p176
    %s179 = sadd.s32 %s178, 1
    %p182 = scmp.eq.s32.totalorder %s18, 1
    %p183 = scmp.ne.s32.totalorder %s178, %s180
    %p184 = scmp.eq.s32.totalorder %s18, 0
    %p185 = por %p183, %p184
    %p186 = scmp.ne.s32.totalorder %s178, %s180
    %p187 = scmp.eq.s32.totalorder %s23, 1
    %p188 = por %p186, %p187
    %p189 = scmp.ne.s32.totalorder %s180, %s181
    %p190 = scmp.eq.s32.totalorder %s23, 0
    %p191 = por %p189, %p190
    %p192 = scmp.ne.s32.totalorder %s180, %s181
    %p193 = scmp.eq.s32.totalorder %s24, 1
    %p194 = por %p192, %p193
    %p196 = scmp.ne.s32.totalorder %s181, %s195
    %p197 = scmp.eq.s32.totalorder %s24, 0
    %p198 = por %p196, %p197
    %s200 = sadd.s32 %s199, 1
    %p203 = scmp.eq.s32.totalorder %s18, 1
    %p204 = scmp.ne.s32.totalorder %s199, %s201
    %p205 = scmp.eq.s32.totalorder %s18, 0
    %p206 = por %p204, %p205
    %p207 = scmp.ne.s32.totalorder %s199, %s201
    %p208 = scmp.eq.s32.totalorder %s23, 1
    %p209 = por %p207, %p208
    %p210 = scmp.ne.s32.totalorder %s201, %s202
    %p211 = scmp.eq.s32.totalorder %s23, 0
    %p212 = por %p210, %p211
    %p213 = scmp.ne.s32.totalorder %s201, %s202
    %p214 = scmp.eq.s32.totalorder %s24, 1
    %p215 = por %p213, %p214
    %p217 = scmp.ne.s32.totalorder %s202, %s216
    %p218 = scmp.eq.s32.totalorder %s24, 0
    %p219 = por %p217, %p218
    %s221 = sadd.s32 %s220, 1
    %p224 = scmp.eq.s32.totalorder %s18, 1
    %p225 = scmp.ne.s32.totalorder %s220, %s222
    %p226 = scmp.eq.s32.totalorder %s18, 0
    %p227 = por %p225, %p226
    %p228 = scmp.ne.s32.totalorder %s220, %s222
    %p229 = scmp.eq.s32.totalorder %s23, 1
    %p230 = por %p228, %p229
    %p231 = scmp.ne.s32.totalorder %s222, %s223
    %p232 = scmp.eq.s32.totalorder %s23, 0
    %p233 = por %p231, %p232
    %p234 = scmp.ne.s32.totalorder %s222, %s223
    %p235 = scmp.eq.s32.totalorder %s24, 1
    %p236 = por %p234, %p235
    %p238 = scmp.ne.s32.totalorder %s223, %s237
    %p239 = scmp.eq.s32.totalorder %s24, 0
    %p240 = por %p238, %p239
    %s242 = sadd.s32 %s241, 1
    %p245 = scmp.eq.s32.totalorder %s18, 1
    %p246 = scmp.ne.s32.totalorder %s241, %s243
    %p247 = scmp.eq.s32.totalorder %s18, 0
    %p248 = por %p246, %p247
    %p249 = scmp.ne.s32.totalorder %s241, %s243
    %p250 = scmp.eq.s32.totalorder %s23, 1
    %p251 = por %p249, %p250
    %p252 = scmp.ne.s32.totalorder %s243, %s244
    %p253 = scmp.eq.s32.totalorder %s23, 0
    %p254 = por %p252, %p253
    %p255 = scmp.ne.s32.totalorder %s243, %s244
    %p256 = scmp.eq.s32.totalorder %s24, 1
    %p257 = por %p255, %p256
    %p259 = scmp.ne.s32.totalorder %s244, %s258
    %p260 = scmp.eq.s32.totalorder %s24, 0
    %p261 = por %p259, %p260
    %s263 = sadd.s32 %s262, 1
    %p266 = scmp.eq.s32.totalorder %s18, 1
    %p267 = scmp.ne.s32.totalorder %s262, %s264
    %p268 = scmp.eq.s32.totalorder %s18, 0
    %p269 = por %p267, %p268
    %p270 = scmp.ne.s32.totalorder %s262, %s264
    %p271 = scmp.eq.s32.totalorder %s23, 1
    %p272 = por %p270, %p271
    %p273 = scmp.ne.s32.totalorder %s264, %s265
    %p274 = scmp.eq.s32.totalorder %s23, 0
    %p275 = por %p273, %p274
    %p276 = scmp.ne.s32.totalorder %s264, %s265
    %p277 = scmp.eq.s32.totalorder %s24, 1
    %p278 = por %p276, %p277
    %p280 = scmp.ne.s32.totalorder %s265, %s279
    %p281 = scmp.eq.s32.totalorder %s24, 0
    %p282 = por %p280, %p281
    %s283 = ssub.s32 %s18, %s25
    %p284 = scmp.eq.s32.totalorder %s283, 0
    %s286 = sadd.s32 %s285, 1
    %s287 = scalar_select %p284, %s285, %s286
    %p290 = pneg %p284
    %p291 = scmp.eq.s32.totalorder %s18, 1
    %p292 = por %p290, %p291
    %p293 = scmp.ne.s32.totalorder %s285, %s288
    %p294 = scmp.eq.s32.totalorder %s18, 0
    %p295 = por %p293, %p294
    %p296 = scmp.ne.s32.totalorder %s285, %s288
    %p297 = scmp.eq.s32.totalorder %s23, 1
    %p298 = por %p296, %p297
    %p299 = scmp.ne.s32.totalorder %s288, %s289
    %p300 = scmp.eq.s32.totalorder %s23, 0
    %p301 = por %p299, %p300
    %p302 = scmp.ne.s32.totalorder %s288, %s289
    %p303 = scmp.eq.s32.totalorder %s24, 1
    %p304 = por %p302, %p303
    %p306 = scmp.ne.s32.totalorder %s289, %s305
    %p307 = scmp.eq.s32.totalorder %s24, 0
    %p308 = por %p306, %p307
    %p309 = scmp.le.s32.totalorder 1, %s18
    %p310 = scmp.lt.s32.totalorder %s18, 3
    %p311 = pnand %p309, %p310
    %p312 = pneg %p311
    // Predicated region
    $region9: #{parallel_attention_pallas.1} parent=5 // pred_check
      _
    $region10: #{parallel_attention_pallas.1} parent=5 // pred_check_branch
      %314 = sbr.rel (%p311) target = $region12
    $region11: #{parallel_attention_pallas.1} parent=5 // pred_region
      %s315 = ssub.s32 %s18, 1
      // Predicated region
      $region13: #{parallel_attention_pallas.1} parent=11 // pred_check
        %p316 = pneg %p65
      $region14: #{parallel_attention_pallas.1} parent=11 // pred_check_branch
        %318 = sbr.rel (%p316) target = $region16
      $region15: #{parallel_attention_pallas.1} parent=11 // pred_region
        _
      $region16: #{parallel_attention_pallas.1} parent=11 // pred_fallthru
        _
      // Predicated region
      $region17: #{parallel_attention_pallas.1} parent=11 // pred_check
        %p319 = pneg %p86
      $region18: #{parallel_attention_pallas.1} parent=11 // pred_check_branch
        %321 = sbr.rel (%p319) target = $region20
      $region19: #{parallel_attention_pallas.1} parent=11 // pred_region
        _
      $region20: #{parallel_attention_pallas.1} parent=11 // pred_fallthru
        _
      // Predicated region
      $region21: #{parallel_attention_pallas.1} parent=11 // pred_check
        %p322 = pneg %p107
      $region22: #{parallel_attention_pallas.1} parent=11 // pred_check_branch
        %324 = sbr.rel (%p322) target = $region24
      $region23: #{parallel_attention_pallas.1} parent=11 // pred_region
        _
      $region24: #{parallel_attention_pallas.1} parent=11 // pred_fallthru
        _
      // Predicated region
      $region25: #{parallel_attention_pallas.1} parent=11 // pred_check
        %p325 = pneg %p128
      $region26: #{parallel_attention_pallas.1} parent=11 // pred_check_branch
        %327 = sbr.rel (%p325) target = $region28
      $region27: #{parallel_attention_pallas.1} parent=11 // pred_region
        _
      $region28: #{parallel_attention_pallas.1} parent=11 // pred_fallthru
        _
      // Predicated region
      $region29: #{parallel_attention_pallas.1} parent=11 // pred_check
        %p328 = pneg %p149
      $region30: #{parallel_attention_pallas.1} parent=11 // pred_check_branch
        %330 = sbr.rel (%p328) target = $region32
      $region31: #{parallel_attention_pallas.1} parent=11 // pred_region
        _
      $region32: #{parallel_attention_pallas.1} parent=11 // pred_fallthru
        _
      // Predicated region
      $region33: #{parallel_attention_pallas.1} parent=11 // pred_check
        %p331 = pneg %p170
      $region34: #{parallel_attention_pallas.1} parent=11 // pred_check_branch
        %333 = sbr.rel (%p331) target = $region36
      $region35: #{parallel_attention_pallas.1} parent=11 // pred_region
        _
      $region36: #{parallel_attention_pallas.1} parent=11 // pred_fallthru
        _
      // Predicated region
      $region37: #{parallel_attention_pallas.1} parent=11 // pred_check
        %p334 = pneg %p191
      $region38: #{parallel_attention_pallas.1} parent=11 // pred_check_branch
        %336 = sbr.rel (%p334) target = $region40
      $region39: #{parallel_attention_pallas.1} parent=11 // pred_region
        _
      $region40: #{parallel_attention_pallas.1} parent=11 // pred_fallthru
        _
      // Predicated region
      $region41: #{parallel_attention_pallas.1} parent=11 // pred_check
        %p337 = pneg %p212
      $region42: #{parallel_attention_pallas.1} parent=11 // pred_check_branch
        %339 = sbr.rel (%p337) target = $region44
      $region43: #{parallel_attention_pallas.1} parent=11 // pred_region
        _
      $region44: #{parallel_attention_pallas.1} parent=11 // pred_fallthru
        _
      // Predicated region
      $region45: #{parallel_attention_pallas.1} parent=11 // pred_check
        %p340 = pneg %p233
      $region46: #{parallel_attention_pallas.1} parent=11 // pred_check_branch
        %342 = sbr.rel (%p340) target = $region48
      $region47: #{parallel_attention_pallas.1} parent=11 // pred_region
        _
      $region48: #{parallel_attention_pallas.1} parent=11 // pred_fallthru
        _
      // Predicated region
      $region49: #{parallel_attention_pallas.1} parent=11 // pred_check
        %p343 = pneg %p254
      $region50: #{parallel_attention_pallas.1} parent=11 // pred_check_branch
        %345 = sbr.rel (%p343) target = $region52
      $region51: #{parallel_attention_pallas.1} parent=11 // pred_region
        _
      $region52: #{parallel_attention_pallas.1} parent=11 // pred_fallthru
        _
      // Predicated region
      $region53: #{parallel_attention_pallas.1} parent=11 // pred_check
        %p346 = pneg %p275
      $region54: #{parallel_attention_pallas.1} parent=11 // pred_check_branch
        %348 = sbr.rel (%p346) target = $region56
      $region55: #{parallel_attention_pallas.1} parent=11 // pred_region
        _
      $region56: #{parallel_attention_pallas.1} parent=11 // pred_fallthru
        _
    $region12: #{parallel_attention_pallas.1} parent=5 // pred_fallthru
      _
    %p349 = scmp.lt.s32.totalorder %s18, 2
    // Predicated region
    $region57: #{parallel_attention_pallas.1} parent=5 // pred_check
      %p350 = pneg %p349
    $region58: #{parallel_attention_pallas.1} parent=5 // pred_check_branch
      %352 = sbr.rel (%p350) target = $region60
    $region59: #{parallel_attention_pallas.1} parent=5 // pred_region
      // Predicated region
      $region61: #{parallel_attention_pallas.1} parent=59 // pred_check
        %p353 = pneg %p38
      $region62: #{parallel_attention_pallas.1} parent=59 // pred_check_branch
        %355 = sbr.rel (%p353) target = $region64
      $region63: #{parallel_attention_pallas.1} parent=59 // pred_region
        %p356 = scmp.lt.s32.totalorder %s18, 1
        %s357 = scalar_select %p356, %s18, 1
        %s358 = smul.addr %s357, 16
        %s359 = smul.addr %s358, 8
        %s360 = scalar_lea.vmem %s0, %s359
      $region64: #{parallel_attention_pallas.1} parent=59 // pred_fallthru
        _
    $region60: #{parallel_attention_pallas.1} parent=5 // pred_fallthru
      _
    %p361 = scmp.le.s32.totalorder 1, %s18
    %p362 = scmp.lt.s32.totalorder %s18, 3
    %p363 = pnand %p361, %p362
    %p364 = pneg %p363
    // Predicated region
    $region65: #{parallel_attention_pallas.1} parent=5 // pred_check
      _
    $region66: #{parallel_attention_pallas.1} parent=5 // pred_check_branch
      %366 = sbr.rel (%p363) target = $region68
    $region67: #{parallel_attention_pallas.1} parent=5 // pred_region
      %s367 = ssub.s32 %s18, 1
      %p368 = scmp.lt.s32.totalorder %s23, 1
      %s369 = scalar_select %p368, %s23, 1
      %s370 = smul.addr %s369, 16
      %s371 = smul.addr %s370, 8
      %s372 = scalar_lea.vmem %s0, %s371
      %p373 = pneg %p44
      %p374 = pneg %p41
      %p375 = pneg %p65
      %p376 = pneg %p62
      %p377 = pneg %p86
      %p378 = pneg %p83
      %p379 = pneg %p107
      %p380 = pneg %p104
      %p381 = pneg %p128
      %p382 = pneg %p125
      %p383 = pneg %p149
      %p384 = pneg %p146
      %p385 = pneg %p170
      %p386 = pneg %p167
      %p387 = pneg %p191
      %p388 = pneg %p188
      %p389 = pneg %p212
      %p390 = pneg %p209
      %p391 = pneg %p233
      %p392 = pneg %p230
      %p393 = pneg %p254
      %p394 = pneg %p251
      %p395 = pneg %p275
      %p396 = pneg %p272
      %p397 = pneg %p301
      %p398 = pneg %p298
      %p399 = scmp.lt.s32.totalorder %s23, 1
      %s400 = scalar_select %p399, %s23, 1
      %s401 = smul.addr %s400, 16
      %s402 = smul.addr %s401, 8
      %s403 = scalar_lea.vmem %s12, %s402
      %p404 = scmp.lt.s32.totalorder %s23, 1
      %s405 = scalar_select %p404, %s23, 1
      %s406 = smul.addr %s405, 16
      %s407 = smul.addr %s406, 8
      %s408 = scalar_lea.vmem %s0, %s407
      %p409 = scmp.lt.s32.totalorder %s23, 1
      %s410 = scalar_select %p409, %s23, 1
      %s411 = smul.addr %s410, 16
      %s412 = smul.addr %s411, 8
      %s413 = scalar_lea.vmem %s12, %s412
      %v414 = vld [vmem:[%s408] sm:$0xff]
      %v415 = vld [vmem:[%s408 + $0x8] sm:$0xff]
      %v416 = vld [vmem:[%s408 + $0x10] sm:$0xff]
      %v417 = vld [vmem:[%s408 + $0x18] sm:$0xff]
      %v418 = vld [vmem:[%s408 + $0x20] sm:$0xff]
      %v419 = vld [vmem:[%s408 + $0x28] sm:$0xff]
      %v420 = vld [vmem:[%s408 + $0x30] sm:$0xff]
      %v421 = vld [vmem:[%s408 + $0x38] sm:$0xff]
      %v422 = vld [vmem:[%s408 + $0x40] sm:$0xff]
      %v423 = vld [vmem:[%s408 + $0x48] sm:$0xff]
      %v424 = vld [vmem:[%s408 + $0x50] sm:$0xff]
      %v425 = vld [vmem:[%s408 + $0x58] sm:$0xff]
      %v426 = vld [vmem:[%s408 + $0x60] sm:$0xff]
      %v427 = vld [vmem:[%s408 + $0x68] sm:$0xff]
      %v428 = vld [vmem:[%s408 + $0x70] sm:$0xff]
      %v429 = vld [vmem:[%s408 + $0x78] sm:$0xff]
      %v430 = vld [vmem:[%s1] sm:$0xff]
      %v431 = vld [vmem:[%s1 + $0x8] sm:$0xff]
      %v432 = vld [vmem:[%s1 + $0x10] sm:$0xff]
      %v433 = vld [vmem:[%s1 + $0x18] sm:$0xff]
      %v434 = vld [vmem:[%s1 + $0x20] sm:$0xff]
      %v435 = vld [vmem:[%s1 + $0x28] sm:$0xff]
      %v436 = vld [vmem:[%s1 + $0x30] sm:$0xff]
      %v437 = vld [vmem:[%s1 + $0x38] sm:$0xff]
      %v438 = vld [vmem:[%s1 + $0x40] sm:$0xff]
      %v439 = vld [vmem:[%s1 + $0x48] sm:$0xff]
      %v440 = vld [vmem:[%s1 + $0x50] sm:$0xff]
      %v441 = vld [vmem:[%s1 + $0x58] sm:$0xff]
      %v442 = vld [vmem:[%s1 + $0x60] sm:$0xff]
      %v443 = vld [vmem:[%s1 + $0x68] sm:$0xff]
      %v444 = vld [vmem:[%s1 + $0x70] sm:$0xff]
      %v445 = vld [vmem:[%s1 + $0x78] sm:$0xff]
      %447 = vset.pattern.permute.xlu0 0
      %448 = vperm.xlu0 %447, %v430
      %v449 = vpop.permute.xlu0 %448
      %452 = vset.pattern.permute.xlu0 0
      %453 = vperm.xlu0 %452, %v431
      %v454 = vpop.permute.xlu0 %453
      %457 = vset.pattern.permute.xlu0 0
      %458 = vperm.xlu0 %457, %v432
      %v459 = vpop.permute.xlu0 %458
      %462 = vset.pattern.permute.xlu0 0
      %463 = vperm.xlu0 %462, %v433
      %v464 = vpop.permute.xlu0 %463
      %467 = vset.pattern.permute.xlu0 0
      %468 = vperm.xlu0 %467, %v434
      %v469 = vpop.permute.xlu0 %468
      %472 = vset.pattern.permute.xlu0 0
      %473 = vperm.xlu0 %472, %v435
      %v474 = vpop.permute.xlu0 %473
      %477 = vset.pattern.permute.xlu0 0
      %478 = vperm.xlu0 %477, %v436
      %v479 = vpop.permute.xlu0 %478
      %482 = vset.pattern.permute.xlu0 0
      %483 = vperm.xlu0 %482, %v437
      %v484 = vpop.permute.xlu0 %483
      %487 = vset.pattern.permute.xlu0 0
      %488 = vperm.xlu0 %487, %v438
      %v489 = vpop.permute.xlu0 %488
      %492 = vset.pattern.permute.xlu0 0
      %493 = vperm.xlu0 %492, %v439
      %v494 = vpop.permute.xlu0 %493
      %497 = vset.pattern.permute.xlu0 0
      %498 = vperm.xlu0 %497, %v440
      %v499 = vpop.permute.xlu0 %498
      %502 = vset.pattern.permute.xlu0 0
      %503 = vperm.xlu0 %502, %v441
      %v504 = vpop.permute.xlu0 %503
      %507 = vset.pattern.permute.xlu0 0
      %508 = vperm.xlu0 %507, %v442
      %v509 = vpop.permute.xlu0 %508
      %512 = vset.pattern.permute.xlu0 0
      %513 = vperm.xlu0 %512, %v443
      %v514 = vpop.permute.xlu0 %513
      %517 = vset.pattern.permute.xlu0 0
      %518 = vperm.xlu0 %517, %v444
      %v519 = vpop.permute.xlu0 %518
      %522 = vset.pattern.permute.xlu0 0
      %523 = vperm.xlu0 %522, %v445
      %v524 = vpop.permute.xlu0 %523
      %v526 = vmul.f32 %v414, %v449
      %v527 = vmul.f32 %v415, %v454
      %v528 = vmul.f32 %v416, %v459
      %v529 = vmul.f32 %v417, %v464
      %v530 = vmul.f32 %v418, %v469
      %v531 = vmul.f32 %v419, %v474
      %v532 = vmul.f32 %v420, %v479
      %v533 = vmul.f32 %v421, %v484
      %v534 = vmul.f32 %v422, %v489
      %v535 = vmul.f32 %v423, %v494
      %v536 = vmul.f32 %v424, %v499
      %v537 = vmul.f32 %v425, %v504
      %v538 = vmul.f32 %v426, %v509
      %v539 = vmul.f32 %v427, %v514
      %v540 = vmul.f32 %v428, %v519
      %v541 = vmul.f32 %v429, %v524
      %vm542 = vcmask 523264
      %v543 = vsel %vm542, %v526, 0.0
      %v544 = vsel %vm542, %v527, 0.0
      %v545 = vadd.f32 %v543, %v544
      %v546 = vsel %vm542, %v528, 0.0
      %v547 = vadd.f32 %v545, %v546
      %v548 = vsel %vm542, %v529, 0.0
      %v549 = vadd.f32 %v547, %v548
      %v550 = vsel %vm542, %v530, 0.0
      %v551 = vadd.f32 %v549, %v550
      %v552 = vsel %vm542, %v531, 0.0
      %v553 = vadd.f32 %v551, %v552
      %v554 = vsel %vm542, %v532, 0.0
      %v555 = vadd.f32 %v553, %v554
      %v556 = vsel %vm542, %v533, 0.0
      %v557 = vadd.f32 %v555, %v556
      %v558 = vsel %vm542, %v534, 0.0
      %v559 = vadd.f32 %v557, %v558
      %v560 = vsel %vm542, %v535, 0.0
      %v561 = vadd.f32 %v559, %v560
      %v562 = vsel %vm542, %v536, 0.0
      %v563 = vadd.f32 %v561, %v562
      %v564 = vsel %vm542, %v537, 0.0
      %v565 = vadd.f32 %v563, %v564
      %v566 = vsel %vm542, %v538, 0.0
      %v567 = vadd.f32 %v565, %v566
      %v568 = vsel %vm542, %v539, 0.0
      %v569 = vadd.f32 %v567, %v568
      %v570 = vsel %vm542, %v540, 0.0
      %v571 = vadd.f32 %v569, %v570
      %v572 = vsel %vm542, %v541, 0.0
      %v573 = vadd.f32 %v571, %v572
      %v574 = vrot.slane %v573, 4
      %v575 = vadd.f32 %v573, %v574
      %v576 = vrot.slane %v575, 2
      %v577 = vadd.f32 %v575, %v576
      %v578 = vrot.slane %v577, 1
      %v579 = vadd.f32 %v577, %v578
      %v580 = vsel %vm542, %v579, -inf
      %581 = vmax.xlane.f32.xlu0 %v580
      %v582 = vpop.xlane.xlu0 %581
      %v583 = vsub.f32 %v579, %v582
      %v584 = vmul.f32 %v583, 1.442695
      %v585 = vpow.pop %v584
      %v586 = vsel %vm542, %v585, 0.0
      %587 = vadd.xlane.f32.xlu0 %v586
      %v588 = vpop.xlane.xlu0 %587
      %v589 = vrcp.pop %v588
      %v590 = vmul.f32 %v585, %v589
      %v591 = vmul.f32 %v414, %v590
      %v592 = vmul.f32 %v415, %v590
      %v593 = vmul.f32 %v416, %v590
      %v594 = vmul.f32 %v417, %v590
      %v595 = vmul.f32 %v418, %v590
      %v596 = vmul.f32 %v419, %v590
      %v597 = vmul.f32 %v420, %v590
      %v598 = vmul.f32 %v421, %v590
      %v599 = vmul.f32 %v422, %v590
      %v600 = vmul.f32 %v423, %v590
      %v601 = vmul.f32 %v424, %v590
      %v602 = vmul.f32 %v425, %v590
      %v603 = vmul.f32 %v426, %v590
      %v604 = vmul.f32 %v427, %v590
      %v605 = vmul.f32 %v428, %v590
      %v606 = vmul.f32 %v429, %v590
      %v607 = vsel %vm542, %v591, 0.0
      %608 = vadd.xlane.f32.xlu0 %v607
      %v609 = vpop.xlane.xlu0 %608
      %v610 = vsel %vm542, %v592, 0.0
      %611 = vadd.xlane.f32.xlu0 %v610
      %v612 = vpop.xlane.xlu0 %611
      %v613 = vsel %vm542, %v593, 0.0
      %614 = vadd.xlane.f32.xlu0 %v613
      %v615 = vpop.xlane.xlu0 %614
      %v616 = vsel %vm542, %v594, 0.0
      %617 = vadd.xlane.f32.xlu0 %v616
      %v618 = vpop.xlane.xlu0 %617
      %v619 = vsel %vm542, %v595, 0.0
      %620 = vadd.xlane.f32.xlu0 %v619
      %v621 = vpop.xlane.xlu0 %620
      %v622 = vsel %vm542, %v596, 0.0
      %623 = vadd.xlane.f32.xlu0 %v622
      %v624 = vpop.xlane.xlu0 %623
      %v625 = vsel %vm542, %v597, 0.0
      %626 = vadd.xlane.f32.xlu0 %v625
      %v627 = vpop.xlane.xlu0 %626
      %v628 = vsel %vm542, %v598, 0.0
      %629 = vadd.xlane.f32.xlu0 %v628
      %v630 = vpop.xlane.xlu0 %629
      %v631 = vsel %vm542, %v599, 0.0
      %632 = vadd.xlane.f32.xlu0 %v631
      %v633 = vpop.xlane.xlu0 %632
      %v634 = vsel %vm542, %v600, 0.0
      %635 = vadd.xlane.f32.xlu0 %v634
      %v636 = vpop.xlane.xlu0 %635
      %v637 = vsel %vm542, %v601, 0.0
      %638 = vadd.xlane.f32.xlu0 %v637
      %v639 = vpop.xlane.xlu0 %638
      %v640 = vsel %vm542, %v602, 0.0
      %641 = vadd.xlane.f32.xlu0 %v640
      %v642 = vpop.xlane.xlu0 %641
      %v643 = vsel %vm542, %v603, 0.0
      %644 = vadd.xlane.f32.xlu0 %v643
      %v645 = vpop.xlane.xlu0 %644
      %v646 = vsel %vm542, %v604, 0.0
      %647 = vadd.xlane.f32.xlu0 %v646
      %v648 = vpop.xlane.xlu0 %647
      %v649 = vsel %vm542, %v605, 0.0
      %650 = vadd.xlane.f32.xlu0 %v649
      %v651 = vpop.xlane.xlu0 %650
      %v652 = vsel %vm542, %v606, 0.0
      %653 = vadd.xlane.f32.xlu0 %v652
      %v654 = vpop.xlane.xlu0 %653
      %v655 = vld [vmem:[%s2] sm:$0xff]
      %v656 = vld [vmem:[%s2 + $0x8] sm:$0xff]
      %v657 = vld [vmem:[%s2 + $0x10] sm:$0xff]
      %v658 = vld [vmem:[%s2 + $0x18] sm:$0xff]
      %v659 = vld [vmem:[%s2 + $0x20] sm:$0xff]
      %v660 = vld [vmem:[%s2 + $0x28] sm:$0xff]
      %v661 = vld [vmem:[%s2 + $0x30] sm:$0xff]
      %v662 = vld [vmem:[%s2 + $0x38] sm:$0xff]
      %v663 = vld [vmem:[%s3] sm:$0xff]
      %v664 = vld [vmem:[%s3 + $0x8] sm:$0xff]
      %v665 = vld [vmem:[%s3 + $0x10] sm:$0xff]
      %v666 = vld [vmem:[%s3 + $0x18] sm:$0xff]
      %v667 = vld [vmem:[%s3 + $0x20] sm:$0xff]
      %v668 = vld [vmem:[%s3 + $0x28] sm:$0xff]
      %v669 = vld [vmem:[%s3 + $0x30] sm:$0xff]
      %v670 = vld [vmem:[%s3 + $0x38] sm:$0xff]
      %671 = vmatprep.subr.mxu0 0.0
      %672 = vmatpush1.msra.mxu0 %v609
      %673 = vmatprep.subr.mxu0 0.0
      %674 = vmatpush1.msra.mxu0 %v612
      %675 = vmatprep.subr.mxu0 0.0
      %676 = vmatpush1.msra.mxu0 %v615
      %677 = vmatprep.subr.mxu0 0.0
      %678 = vmatpush1.msra.mxu0 %v618
      %679 = vmatprep.subr.mxu0 0.0
      %680 = vmatpush1.msra.mxu0 %v621
      %681 = vmatprep.subr.mxu0 0.0
      %682 = vmatpush1.msra.mxu0 %v624
      %683 = vmatprep.subr.mxu0 0.0
      %684 = vmatpush1.msra.mxu0 %v627
      %685 = vmatprep.subr.mxu0 0.0
      %686 = vmatpush1.msra.mxu0 %v630
      %687 = vmatprep.subr.mxu0 0.0
      %688 = vmatpush1.msra.mxu0 %v633
      %689 = vmatprep.subr.mxu0 0.0
      %690 = vmatpush1.msra.mxu0 %v636
      %691 = vmatprep.subr.mxu0 0.0
      %692 = vmatpush1.msra.mxu0 %v639
      %693 = vmatprep.subr.mxu0 0.0
      %694 = vmatpush1.msra.mxu0 %v642
      %695 = vmatprep.subr.mxu0 0.0
      %696 = vmatpush1.msra.mxu0 %v645
      %697 = vmatprep.subr.mxu0 0.0
      %698 = vmatpush1.msra.mxu0 %v648
      %699 = vmatprep.subr.mxu0 0.0
      %700 = vmatpush1.msra.mxu0 %v651
      %701 = vmatprep.subr.mxu0 0.0
      %702 = vmatpush1.msra.mxu0 %v654
      %703 = vmatprep.subr.mxu0 0.0
      %704 = vmatpush1.msra.mxu0 0.0
      %705 = vmatprep.subr.mxu0 0.0
      %706 = vmatpush1.msra.mxu0 0.0
      %707 = vmatprep.subr.mxu0 0.0
      %708 = vmatpush1.msra.mxu0 0.0
      %709 = vmatprep.subr.mxu0 0.0
      %710 = vmatpush1.msra.mxu0 0.0
      %711 = vmatprep.subr.mxu0 0.0
      %712 = vmatpush1.msra.mxu0 0.0
      %713 = vmatprep.subr.mxu0 0.0
      %714 = vmatpush1.msra.mxu0 0.0
      %715 = vmatprep.subr.mxu0 0.0
      %716 = vmatpush1.msra.mxu0 0.0
      %717 = vmatprep.subr.mxu0 0.0
      %718 = vmatpush1.msra.mxu0 0.0
      %719 = vmatprep.subr.mxu0 0.0
      %720 = vmatpush1.msra.mxu0 0.0
      %721 = vmatprep.subr.mxu0 0.0
      %722 = vmatpush1.msra.mxu0 0.0
      %723 = vmatprep.subr.mxu0 0.0
      %724 = vmatpush1.msra.mxu0 0.0
      %725 = vmatprep.subr.mxu0 0.0
      %726 = vmatpush1.msra.mxu0 0.0
      %727 = vmatprep.subr.mxu0 0.0
      %728 = vmatpush1.msra.mxu0 0.0
      %729 = vmatprep.subr.mxu0 0.0
      %730 = vmatpush1.msra.mxu0 0.0
      %731 = vmatprep.subr.mxu0 0.0
      %732 = vmatpush1.msra.mxu0 0.0
      %733 = vmatprep.subr.mxu0 0.0
      %734 = vmatpush1.msra.mxu0 0.0
      %735 = vmatprep.mubr.f32.mxu0 0.0
      %736 = vmatmul.mubr.f32.gmra.mrb[0].mxu0 %v655
      %v737 = vpop.f32.mrb[0].mxu0
      %v738 = vadd.f32 %v663, %v737
      %v739 = vpop.f32.mrb[0].mxu0
      %740 = vmatprep.mubr.f32.mxu0 0.0
      %741 = vmatmul.mubr.f32.gmra.mrb[0].mxu0 %v656
      %v742 = vpop.f32.mrb[0].mxu0
      %v743 = vadd.f32 %v664, %v742
      %v744 = vpop.f32.mrb[0].mxu0
      %745 = vmatprep.mubr.f32.mxu0 0.0
      %746 = vmatmul.mubr.f32.gmra.mrb[0].mxu0 %v657
      %v747 = vpop.f32.mrb[0].mxu0
      %v748 = vadd.f32 %v665, %v747
      %v749 = vpop.f32.mrb[0].mxu0
      %750 = vmatprep.mubr.f32.mxu0 0.0
      %751 = vmatmul.mubr.f32.gmra.mrb[0].mxu0 %v658
      %v752 = vpop.f32.mrb[0].mxu0
      %v753 = vadd.f32 %v666, %v752
      %v754 = vpop.f32.mrb[0].mxu0
      %755 = vmatprep.mubr.f32.mxu0 0.0
      %756 = vmatmul.mubr.f32.gmra.mrb[0].mxu0 %v659
      %v757 = vpop.f32.mrb[0].mxu0
      %v758 = vadd.f32 %v667, %v757
      %v759 = vpop.f32.mrb[0].mxu0
      %760 = vmatprep.mubr.f32.mxu0 0.0
      %761 = vmatmul.mubr.f32.gmra.mrb[0].mxu0 %v660
      %v762 = vpop.f32.mrb[0].mxu0
      %v763 = vadd.f32 %v668, %v762
      %v764 = vpop.f32.mrb[0].mxu0
      %765 = vmatprep.mubr.f32.mxu0 0.0
      %766 = vmatmul.mubr.f32.gmra.mrb[0].mxu0 %v661
      %v767 = vpop.f32.mrb[0].mxu0
      %v768 = vadd.f32 %v669, %v767
      %v769 = vpop.f32.mrb[0].mxu0
      %770 = vmatprep.mubr.f32.mxu0 0.0
      %771 = vmatmul.mubr.f32.gmra.mrb[0].mxu0 %v662
      %v772 = vpop.f32.mrb[0].mxu0
      %v773 = vadd.f32 %v670, %v772
      %v774 = vpop.f32.mrb[0].mxu0
      %775 = vdwg.mxu0
      %v776 = vld [vmem:[%s4] sm:$0xff]
      %v777 = vld [vmem:[%s4 + $0x8] sm:$0xff]
      %v778 = vld [vmem:[%s4 + $0x10] sm:$0xff]
      %v779 = vld [vmem:[%s4 + $0x18] sm:$0xff]
      %v780 = vld [vmem:[%s4 + $0x20] sm:$0xff]
      %v781 = vld [vmem:[%s4 + $0x28] sm:$0xff]
      %v782 = vld [vmem:[%s4 + $0x30] sm:$0xff]
      %v783 = vld [vmem:[%s4 + $0x38] sm:$0xff]
      %v784 = vld [vmem:[%s4 + $0x40] sm:$0xff]
      %v785 = vld [vmem:[%s4 + $0x48] sm:$0xff]
      %v786 = vld [vmem:[%s4 + $0x50] sm:$0xff]
      %v787 = vld [vmem:[%s4 + $0x58] sm:$0xff]
      %v788 = vld [vmem:[%s4 + $0x60] sm:$0xff]
      %v789 = vld [vmem:[%s4 + $0x68] sm:$0xff]
      %v790 = vld [vmem:[%s4 + $0x70] sm:$0xff]
      %v791 = vld [vmem:[%s4 + $0x78] sm:$0xff]
      %v792 = vld [vmem:[%s5] sm:$0xff]
      %v793 = vld [vmem:[%s5 + $0x8] sm:$0xff]
      %v794 = vld [vmem:[%s5 + $0x10] sm:$0xff]
      %v795 = vld [vmem:[%s5 + $0x18] sm:$0xff]
      %v796 = vld [vmem:[%s5 + $0x20] sm:$0xff]
      %v797 = vld [vmem:[%s5 + $0x28] sm:$0xff]
      %v798 = vld [vmem:[%s5 + $0x30] sm:$0xff]
      %v799 = vld [vmem:[%s5 + $0x38] sm:$0xff]
      %v800 = vld [vmem:[%s5 + $0x40] sm:$0xff]
      %v801 = vld [vmem:[%s5 + $0x48] sm:$0xff]
      %v802 = vld [vmem:[%s5 + $0x50] sm:$0xff]
      %v803 = vld [vmem:[%s5 + $0x58] sm:$0xff]
      %v804 = vld [vmem:[%s5 + $0x60] sm:$0xff]
      %v805 = vld [vmem:[%s5 + $0x68] sm:$0xff]
      %v806 = vld [vmem:[%s5 + $0x70] sm:$0xff]
      %v807 = vld [vmem:[%s5 + $0x78] sm:$0xff]
      %v809 = vsel %vm542, %v776, 0
      %v812 = vsel %vm542, %v777, 0
      %v815 = vsel %vm542, %v778, 0
      %v818 = vsel %vm542, %v779, 0
      %v821 = vsel %vm542, %v780, 0
      %v824 = vsel %vm542, %v781, 0
      %v827 = vsel %vm542, %v782, 0
      %v830 = vsel %vm542, %v783, 0
      %v833 = vsel %vm542, %v784, 0
      %v836 = vsel %vm542, %v785, 0
      %v839 = vsel %vm542, %v786, 0
      %v842 = vsel %vm542, %v787, 0
      %v845 = vsel %vm542, %v788, 0
      %v848 = vsel %vm542, %v789, 0
      %v851 = vsel %vm542, %v790, 0
      %v854 = vsel %vm542, %v791, 0
      %856 = vmatprep.subr.mxu0 0.0
      %857 = vmatpush1.msra.mxu0 %v738
      %858 = vmatprep.subr.mxu0 0.0
      %859 = vmatpush1.msra.mxu0 %v743
      %860 = vmatprep.subr.mxu0 0.0
      %861 = vmatpush1.msra.mxu0 %v748
      %862 = vmatprep.subr.mxu0 0.0
      %863 = vmatpush1.msra.mxu0 %v753
      %864 = vmatprep.subr.mxu0 0.0
      %865 = vmatpush1.msra.mxu0 %v758
      %866 = vmatprep.subr.mxu0 0.0
      %867 = vmatpush1.msra.mxu0 %v763
      %868 = vmatprep.subr.mxu0 0.0
      %869 = vmatpush1.msra.mxu0 %v768
      %870 = vmatprep.subr.mxu0 0.0
      %871 = vmatpush1.msra.mxu0 %v773
      %872 = vmatprep.subr.mxu0 0.0
      %873 = vmatpush1.msra.mxu0 0.0
      %874 = vmatprep.subr.mxu0 0.0
      %875 = vmatpush1.msra.mxu0 0.0
      %876 = vmatprep.subr.mxu0 0.0
      %877 = vmatpush1.msra.mxu0 0.0
      %878 = vmatprep.subr.mxu0 0.0
      %879 = vmatpush1.msra.mxu0 0.0
      %880 = vmatprep.subr.mxu0 0.0
      %881 = vmatpush1.msra.mxu0 0.0
      %882 = vmatprep.subr.mxu0 0.0
      %883 = vmatpush1.msra.mxu0 0.0
      %884 = vmatprep.subr.mxu0 0.0
      %885 = vmatpush1.msra.mxu0 0.0
      %886 = vmatprep.subr.mxu0 0.0
      %887 = vmatpush1.msra.mxu0 0.0
      %888 = vmatprep.subr.mxu0 0.0
      %889 = vmatpush1.msra.mxu0 0.0
      %890 = vmatprep.subr.mxu0 0.0
      %891 = vmatpush1.msra.mxu0 0.0
      %892 = vmatprep.subr.mxu0 0.0
      %893 = vmatpush1.msra.mxu0 0.0
      %894 = vmatprep.subr.mxu0 0.0
      %895 = vmatpush1.msra.mxu0 0.0
      %896 = vmatprep.subr.mxu0 0.0
      %897 = vmatpush1.msra.mxu0 0.0
      %898 = vmatprep.subr.mxu0 0.0
      %899 = vmatpush1.msra.mxu0 0.0
      %900 = vmatprep.subr.mxu0 0.0
      %901 = vmatpush1.msra.mxu0 0.0
      %902 = vmatprep.subr.mxu0 0.0
      %903 = vmatpush1.msra.mxu0 0.0
      %904 = vmatprep.subr.mxu0 0.0
      %905 = vmatpush1.msra.mxu0 0.0
      %906 = vmatprep.subr.mxu0 0.0
      %907 = vmatpush1.msra.mxu0 0.0
      %908 = vmatprep.subr.mxu0 0.0
      %909 = vmatpush1.msra.mxu0 0.0
      %910 = vmatprep.subr.mxu0 0.0
      %911 = vmatpush1.msra.mxu0 0.0
      %912 = vmatprep.subr.mxu0 0.0
      %913 = vmatpush1.msra.mxu0 0.0
      %914 = vmatprep.subr.mxu0 0.0
      %915 = vmatpush1.msra.mxu0 0.0
      %916 = vmatprep.subr.mxu0 0.0
      %917 = vmatpush1.msra.mxu0 0.0
      %918 = vmatprep.subr.mxu0 0.0
      %919 = vmatpush1.msra.mxu0 0.0
      %920 = vmatprep.mubr.f32.mxu0 0.0
      %921 = vmatmul.mubr.f32.gmra.mrb[0].mxu0 %v809
      %v922 = vpop.f32.mrb[0].mxu0
      %v923 = vadd.f32 %v792, %v922
      %v924 = vpop.f32.mrb[0].mxu0
      %925 = vmatprep.mubr.f32.mxu0 0.0
      %926 = vmatmul.mubr.f32.gmra.mrb[0].mxu0 %v812
      %v927 = vpop.f32.mrb[0].mxu0
      %v928 = vadd.f32 %v793, %v927
      %v929 = vpop.f32.mrb[0].mxu0
      %930 = vmatprep.mubr.f32.mxu0 0.0
      %931 = vmatmul.mubr.f32.gmra.mrb[0].mxu0 %v815
      %v932 = vpop.f32.mrb[0].mxu0
      %v933 = vadd.f32 %v794, %v932
      %v934 = vpop.f32.mrb[0].mxu0
      %935 = vmatprep.mubr.f32.mxu0 0.0
      %936 = vmatmul.mubr.f32.gmra.mrb[0].mxu0 %v818
      %v937 = vpop.f32.mrb[0].mxu0
      %v938 = vadd.f32 %v795, %v937
      %v939 = vpop.f32.mrb[0].mxu0
      %940 = vmatprep.mubr.f32.mxu0 0.0
      %941 = vmatmul.mubr.f32.gmra.mrb[0].mxu0 %v821
      %v942 = vpop.f32.mrb[0].mxu0
      %v943 = vadd.f32 %v796, %v942
      %v944 = vpop.f32.mrb[0].mxu0
      %945 = vmatprep.mubr.f32.mxu0 0.0
      %946 = vmatmul.mubr.f32.gmra.mrb[0].mxu0 %v824
      %v947 = vpop.f32.mrb[0].mxu0
      %v948 = vadd.f32 %v797, %v947
      %v949 = vpop.f32.mrb[0].mxu0
      %950 = vmatprep.mubr.f32.mxu0 0.0
      %951 = vmatmul.mubr.f32.gmra.mrb[0].mxu0 %v827
      %v952 = vpop.f32.mrb[0].mxu0
      %v953 = vadd.f32 %v798, %v952
      %v954 = vpop.f32.mrb[0].mxu0
      %955 = vmatprep.mubr.f32.mxu0 0.0
      %956 = vmatmul.mubr.f32.gmra.mrb[0].mxu0 %v830
      %v957 = vpop.f32.mrb[0].mxu0
      %v958 = vadd.f32 %v799, %v957
      %v959 = vpop.f32.mrb[0].mxu0
      %960 = vmatprep.mubr.f32.mxu0 0.0
      %961 = vmatmul.mubr.f32.gmra.mrb[0].mxu0 %v833
      %v962 = vpop.f32.mrb[0].mxu0
      %v963 = vadd.f32 %v800, %v962
      %v964 = vpop.f32.mrb[0].mxu0
      %965 = vmatprep.mubr.f32.mxu0 0.0
      %966 = vmatmul.mubr.f32.gmra.mrb[0].mxu0 %v836
      %v967 = vpop.f32.mrb[0].mxu0
      %v968 = vadd.f32 %v801, %v967
      %v969 = vpop.f32.mrb[0].mxu0
      %970 = vmatprep.mubr.f32.mxu0 0.0
      %971 = vmatmul.mubr.f32.gmra.mrb[0].mxu0 %v839
      %v972 = vpop.f32.mrb[0].mxu0
      %v973 = vadd.f32 %v802, %v972
      %v974 = vpop.f32.mrb[0].mxu0
      %975 = vmatprep.mubr.f32.mxu0 0.0
      %976 = vmatmul.mubr.f32.gmra.mrb[0].mxu0 %v842
      %v977 = vpop.f32.mrb[0].mxu0
      %v978 = vadd.f32 %v803, %v977
      %v979 = vpop.f32.mrb[0].mxu0
      %980 = vmatprep.mubr.f32.mxu0 0.0
      %981 = vmatmul.mubr.f32.gmra.mrb[0].mxu0 %v845
      %v982 = vpop.f32.mrb[0].mxu0
      %v983 = vadd.f32 %v804, %v982
      %v984 = vpop.f32.mrb[0].mxu0
      %985 = vmatprep.mubr.f32.mxu0 0.0
      %986 = vmatmul.mubr.f32.gmra.mrb[0].mxu0 %v848
      %v987 = vpop.f32.mrb[0].mxu0
      %v988 = vadd.f32 %v805, %v987
      %v989 = vpop.f32.mrb[0].mxu0
      %990 = vmatprep.mubr.f32.mxu0 0.0
      %991 = vmatmul.mubr.f32.gmra.mrb[0].mxu0 %v851
      %v992 = vpop.f32.mrb[0].mxu0
      %v993 = vadd.f32 %v806, %v992
      %v994 = vpop.f32.mrb[0].mxu0
      %995 = vmatprep.mubr.f32.mxu0 0.0
      %996 = vmatmul.mubr.f32.gmra.mrb[0].mxu0 %v854
      %v997 = vpop.f32.mrb[0].mxu0
      %v998 = vadd.f32 %v807, %v997
      %v999 = vpop.f32.mrb[0].mxu0
      %1000 = vdwg.mxu0
      %vm1001 = vcmask 7168
      %v1002 = vsel %vm1001, %v923, 0.0
      %v1003 = vsel %vm1001, %v928, 0.0
      %v1004 = vadd.f32 %v1002, %v1003
      %v1005 = vsel %vm1001, %v933, 0.0
      %v1006 = vadd.f32 %v1004, %v1005
      %v1007 = vsel %vm1001, %v938, 0.0
      %v1008 = vadd.f32 %v1006, %v1007
      %v1009 = vsel %vm1001, %v943, 0.0
      %v1010 = vadd.f32 %v1008, %v1009
      %v1011 = vsel %vm1001, %v948, 0.0
      %v1012 = vadd.f32 %v1010, %v1011
      %v1013 = vsel %vm1001, %v953, 0.0
      %v1014 = vadd.f32 %v1012, %v1013
      %v1015 = vsel %vm1001, %v958, 0.0
      %v1016 = vadd.f32 %v1014, %v1015
      %v1017 = vsel %vm1001, %v963, 0.0
      %v1018 = vadd.f32 %v1016, %v1017
      %v1019 = vsel %vm1001, %v968, 0.0
      %v1020 = vadd.f32 %v1018, %v1019
      %v1021 = vsel %vm1001, %v973, 0.0
      %v1022 = vadd.f32 %v1020, %v1021
      %v1023 = vsel %vm1001, %v978, 0.0
      %v1024 = vadd.f32 %v1022, %v1023
      %v1025 = vsel %vm1001, %v983, 0.0
      %v1026 = vadd.f32 %v1024, %v1025
      %v1027 = vsel %vm1001, %v988, 0.0
      %v1028 = vadd.f32 %v1026, %v1027
      %v1029 = vsel %vm1001, %v993, 0.0
      %v1030 = vadd.f32 %v1028, %v1029
      %v1031 = vsel %vm1001, %v998, 0.0
      %v1032 = vadd.f32 %v1030, %v1031
      %v1033 = vrot.slane %v1032, 4
      %v1034 = vadd.f32 %v1032, %v1033
      %v1035 = vrot.slane %v1034, 2
      %v1036 = vadd.f32 %v1034, %v1035
      %v1037 = vrot.slane %v1036, 1
      %v1038 = vadd.f32 %v1036, %v1037
      %v1039 = vrcp.pop 128.0
      %v1040 = vmul.f32 %v1038, %v1039
      %v1041 = vsub.f32 %v923, %v1040
      %v1042 = vsub.f32 %v928, %v1040
      %v1043 = vsub.f32 %v933, %v1040
      %v1044 = vsub.f32 %v938, %v1040
      %v1045 = vsub.f32 %v943, %v1040
      %v1046 = vsub.f32 %v948, %v1040
      %v1047 = vsub.f32 %v953, %v1040
      %v1048 = vsub.f32 %v958, %v1040
      %v1049 = vsub.f32 %v963, %v1040
      %v1050 = vsub.f32 %v968, %v1040
      %v1051 = vsub.f32 %v973, %v1040
      %v1052 = vsub.f32 %v978, %v1040
      %v1053 = vsub.f32 %v983, %v1040
      %v1054 = vsub.f32 %v988, %v1040
      %v1055 = vsub.f32 %v993, %v1040
      %v1056 = vsub.f32 %v998, %v1040
      %v1057 = vmul.f32 %v1041, %v1041
      %v1058 = vmul.f32 %v1042, %v1042
      %v1059 = vmul.f32 %v1043, %v1043
      %v1060 = vmul.f32 %v1044, %v1044
      %v1061 = vmul.f32 %v1045, %v1045
      %v1062 = vmul.f32 %v1046, %v1046
      %v1063 = vmul.f32 %v1047, %v1047
      %v1064 = vmul.f32 %v1048, %v1048
      %v1065 = vmul.f32 %v1049, %v1049
      %v1066 = vmul.f32 %v1050, %v1050
      %v1067 = vmul.f32 %v1051, %v1051
      %v1068 = vmul.f32 %v1052, %v1052
      %v1069 = vmul.f32 %v1053, %v1053
      %v1070 = vmul.f32 %v1054, %v1054
      %v1071 = vmul.f32 %v1055, %v1055
      %v1072 = vmul.f32 %v1056, %v1056
      %v1073 = vsel %vm1001, %v1057, 0.0
      %v1074 = vsel %vm1001, %v1058, 0.0
      %v1075 = vadd.f32 %v1073, %v1074
      %v1076 = vsel %vm1001, %v1059, 0.0
      %v1077 = vadd.f32 %v1075, %v1076
      %v1078 = vsel %vm1001, %v1060, 0.0
      %v1079 = vadd.f32 %v1077, %v1078
      %v1080 = vsel %vm1001, %v1061, 0.0
      %v1081 = vadd.f32 %v1079, %v1080
      %v1082 = vsel %vm1001, %v1062, 0.0
      %v1083 = vadd.f32 %v1081, %v1082
      %v1084 = vsel %vm1001, %v1063, 0.0
      %v1085 = vadd.f32 %v1083, %v1084
      %v1086 = vsel %vm1001, %v1064, 0.0
      %v1087 = vadd.f32 %v1085, %v1086
      %v1088 = vsel %vm1001, %v1065, 0.0
      %v1089 = vadd.f32 %v1087, %v1088
      %v1090 = vsel %vm1001, %v1066, 0.0
      %v1091 = vadd.f32 %v1089, %v1090
      %v1092 = vsel %vm1001, %v1067, 0.0
      %v1093 = vadd.f32 %v1091, %v1092
      %v1094 = vsel %vm1001, %v1068, 0.0
      %v1095 = vadd.f32 %v1093, %v1094
      %v1096 = vsel %vm1001, %v1069, 0.0
      %v1097 = vadd.f32 %v1095, %v1096
      %v1098 = vsel %vm1001, %v1070, 0.0
      %v1099 = vadd.f32 %v1097, %v1098
      %v1100 = vsel %vm1001, %v1071, 0.0
      %v1101 = vadd.f32 %v1099, %v1100
      %v1102 = vsel %vm1001, %v1072, 0.0
      %v1103 = vadd.f32 %v1101, %v1102
      %v1104 = vrot.slane %v1103, 4
      %v1105 = vadd.f32 %v1103, %v1104
      %v1106 = vrot.slane %v1105, 2
      %v1107 = vadd.f32 %v1105, %v1106
      %v1108 = vrot.slane %v1107, 1
      %v1109 = vadd.f32 %v1107, %v1108
      %v1110 = vmul.f32 %v1109, %v1039
      %v1111 = vadd.f32 %v1110, 1e-05
      %v1112 = vrsqrt.pop %v1111
      %v1113 = vmul.f32 %v1041, %v1112
      %v1114 = vmul.f32 %v1042, %v1112
      %v1115 = vmul.f32 %v1043, %v1112
      %v1116 = vmul.f32 %v1044, %v1112
      %v1117 = vmul.f32 %v1045, %v1112
      %v1118 = vmul.f32 %v1046, %v1112
      %v1119 = vmul.f32 %v1047, %v1112
      %v1120 = vmul.f32 %v1048, %v1112
      %v1121 = vmul.f32 %v1049, %v1112
      %v1122 = vmul.f32 %v1050, %v1112
      %v1123 = vmul.f32 %v1051, %v1112
      %v1124 = vmul.f32 %v1052, %v1112
      %v1125 = vmul.f32 %v1053, %v1112
      %v1126 = vmul.f32 %v1054, %v1112
      %v1127 = vmul.f32 %v1055, %v1112
      %v1128 = vmul.f32 %v1056, %v1112
      %v1129 = vld [vmem:[%s6] sm:$0xff]
      %v1130 = vld [vmem:[%s6 + $0x8] sm:$0xff]
      %v1131 = vld [vmem:[%s6 + $0x10] sm:$0xff]
      %v1132 = vld [vmem:[%s6 + $0x18] sm:$0xff]
      %v1133 = vld [vmem:[%s6 + $0x20] sm:$0xff]
      %v1134 = vld [vmem:[%s6 + $0x28] sm:$0xff]
      %v1135 = vld [vmem:[%s6 + $0x30] sm:$0xff]
      %v1136 = vld [vmem:[%s6 + $0x38] sm:$0xff]
      %v1137 = vld [vmem:[%s6 + $0x40] sm:$0xff]
      %v1138 = vld [vmem:[%s6 + $0x48] sm:$0xff]
      %v1139 = vld [vmem:[%s6 + $0x50] sm:$0xff]
      %v1140 = vld [vmem:[%s6 + $0x58] sm:$0xff]
      %v1141 = vld [vmem:[%s6 + $0x60] sm:$0xff]
      %v1142 = vld [vmem:[%s6 + $0x68] sm:$0xff]
      %v1143 = vld [vmem:[%s6 + $0x70] sm:$0xff]
      %v1144 = vld [vmem:[%s6 + $0x78] sm:$0xff]
      %v1145 = vmul.f32 %v1113, %v1129
      %v1146 = vmul.f32 %v1114, %v1130
      %v1147 = vmul.f32 %v1115, %v1131
      %v1148 = vmul.f32 %v1116, %v1132
      %v1149 = vmul.f32 %v1117, %v1133
      %v1150 = vmul.f32 %v1118, %v1134
      %v1151 = vmul.f32 %v1119, %v1135
      %v1152 = vmul.f32 %v1120, %v1136
      %v1153 = vmul.f32 %v1121, %v1137
      %v1154 = vmul.f32 %v1122, %v1138
      %v1155 = vmul.f32 %v1123, %v1139
      %v1156 = vmul.f32 %v1124, %v1140
      %v1157 = vmul.f32 %v1125, %v1141
      %v1158 = vmul.f32 %v1126, %v1142
      %v1159 = vmul.f32 %v1127, %v1143
      %v1160 = vmul.f32 %v1128, %v1144
      %v1161 = vld [vmem:[%s7] sm:$0xff]
      %v1162 = vld [vmem:[%s7 + $0x8] sm:$0xff]
      %v1163 = vld [vmem:[%s7 + $0x10] sm:$0xff]
      %v1164 = vld [vmem:[%s7 + $0x18] sm:$0xff]
      %v1165 = vld [vmem:[%s7 + $0x20] sm:$0xff]
      %v1166 = vld [vmem:[%s7 + $0x28] sm:$0xff]
      %v1167 = vld [vmem:[%s7 + $0x30] sm:$0xff]
      %v1168 = vld [vmem:[%s7 + $0x38] sm:$0xff]
      %v1169 = vld [vmem:[%s7 + $0x40] sm:$0xff]
      %v1170 = vld [vmem:[%s7 + $0x48] sm:$0xff]
      %v1171 = vld [vmem:[%s7 + $0x50] sm:$0xff]
      %v1172 = vld [vmem:[%s7 + $0x58] sm:$0xff]
      %v1173 = vld [vmem:[%s7 + $0x60] sm:$0xff]
      %v1174 = vld [vmem:[%s7 + $0x68] sm:$0xff]
      %v1175 = vld [vmem:[%s7 + $0x70] sm:$0xff]
      %v1176 = vld [vmem:[%s7 + $0x78] sm:$0xff]
      %v1177 = vadd.f32 %v1145, %v1161
      %v1178 = vadd.f32 %v1146, %v1162
      %v1179 = vadd.f32 %v1147, %v1163
      %v1180 = vadd.f32 %v1148, %v1164
      %v1181 = vadd.f32 %v1149, %v1165
      %v1182 = vadd.f32 %v1150, %v1166
      %v1183 = vadd.f32 %v1151, %v1167
      %v1184 = vadd.f32 %v1152, %v1168
      %v1185 = vadd.f32 %v1153, %v1169
      %v1186 = vadd.f32 %v1154, %v1170
      %v1187 = vadd.f32 %v1155, %v1171
      %v1188 = vadd.f32 %v1156, %v1172
      %v1189 = vadd.f32 %v1157, %v1173
      %v1190 = vadd.f32 %v1158, %v1174
      %v1191 = vadd.f32 %v1159, %v1175
      %v1192 = vadd.f32 %v1160, %v1176
      %v1193 = vxor.u32 %v1177, 2147483648
      %v1194 = vxor.u32 %v1178, 2147483648
      %v1195 = vxor.u32 %v1179, 2147483648
      %v1196 = vxor.u32 %v1180, 2147483648
      %v1197 = vxor.u32 %v1181, 2147483648
      %v1198 = vxor.u32 %v1182, 2147483648
      %v1199 = vxor.u32 %v1183, 2147483648
      %v1200 = vxor.u32 %v1184, 2147483648
      %v1201 = vxor.u32 %v1185, 2147483648
      %v1202 = vxor.u32 %v1186, 2147483648
      %v1203 = vxor.u32 %v1187, 2147483648
      %v1204 = vxor.u32 %v1188, 2147483648
      %v1205 = vxor.u32 %v1189, 2147483648
      %v1206 = vxor.u32 %v1190, 2147483648
      %v1207 = vxor.u32 %v1191, 2147483648
      %v1208 = vxor.u32 %v1192, 2147483648
      %v1209 = vmul.f32 %v1193, 1.442695
      %v1210 = vpow.pop %v1209
      %v1211 = vmul.f32 %v1194, 1.442695
      %v1212 = vpow.pop %v1211
      %v1213 = vmul.f32 %v1195, 1.442695
      %v1214 = vpow.pop %v1213
      %v1215 = vmul.f32 %v1196, 1.442695
      %v1216 = vpow.pop %v1215
      %v1217 = vmul.f32 %v1197, 1.442695
      %v1218 = vpow.pop %v1217
      %v1219 = vmul.f32 %v1198, 1.442695
      %v1220 = vpow.pop %v1219
      %v1221 = vmul.f32 %v1199, 1.442695
      %v1222 = vpow.pop %v1221
      %v1223 = vmul.f32 %v1200, 1.442695
      %v1224 = vpow.pop %v1223
      %v1225 = vmul.f32 %v1201, 1.442695
      %v1226 = vpow.pop %v1225
      %v1227 = vmul.f32 %v1202, 1.442695
      %v1228 = vpow.pop %v1227
      %v1229 = vmul.f32 %v1203, 1.442695
      %v1230 = vpow.pop %v1229
      %v1231 = vmul.f32 %v1204, 1.442695
      %v1232 = vpow.pop %v1231
      %v1233 = vmul.f32 %v1205, 1.442695
      %v1234 = vpow.pop %v1233
      %v1235 = vmul.f32 %v1206, 1.442695
      %v1236 = vpow.pop %v1235
      %v1237 = vmul.f32 %v1207, 1.442695
      %v1238 = vpow.pop %v1237
      %v1239 = vmul.f32 %v1208, 1.442695
      %v1240 = vpow.pop %v1239
      %v1241 = vadd.f32 %v1210, 1.0
      %v1242 = vadd.f32 %v1212, 1.0
      %v1243 = vadd.f32 %v1214, 1.0
      %v1244 = vadd.f32 %v1216, 1.0
      %v1245 = vadd.f32 %v1218, 1.0
      %v1246 = vadd.f32 %v1220, 1.0
      %v1247 = vadd.f32 %v1222, 1.0
      %v1248 = vadd.f32 %v1224, 1.0
      %v1249 = vadd.f32 %v1226, 1.0
      %v1250 = vadd.f32 %v1228, 1.0
      %v1251 = vadd.f32 %v1230, 1.0
      %v1252 = vadd.f32 %v1232, 1.0
      %v1253 = vadd.f32 %v1234, 1.0
      %v1254 = vadd.f32 %v1236, 1.0
      %v1255 = vadd.f32 %v1238, 1.0
      %v1256 = vadd.f32 %v1240, 1.0
      %v1257 = vrcp.pop %v1241
      %v1258 = vmul.f32 1.0, %v1257
      %v1259 = vrcp.pop %v1242
      %v1260 = vmul.f32 1.0, %v1259
      %v1261 = vrcp.pop %v1243
      %v1262 = vmul.f32 1.0, %v1261
      %v1263 = vrcp.pop %v1244
      %v1264 = vmul.f32 1.0, %v1263
      %v1265 = vrcp.pop %v1245
      %v1266 = vmul.f32 1.0, %v1265
      %v1267 = vrcp.pop %v1246
      %v1268 = vmul.f32 1.0, %v1267
      %v1269 = vrcp.pop %v1247
      %v1270 = vmul.f32 1.0, %v1269
      %v1271 = vrcp.pop %v1248
      %v1272 = vmul.f32 1.0, %v1271
      %v1273 = vrcp.pop %v1249
      %v1274 = vmul.f32 1.0, %v1273
      %v1275 = vrcp.pop %v1250
      %v1276 = vmul.f32 1.0, %v1275
      %v1277 = vrcp.pop %v1251
      %v1278 = vmul.f32 1.0, %v1277
      %v1279 = vrcp.pop %v1252
      %v1280 = vmul.f32 1.0, %v1279
      %v1281 = vrcp.pop %v1253
      %v1282 = vmul.f32 1.0, %v1281
      %v1283 = vrcp.pop %v1254
      %v1284 = vmul.f32 1.0, %v1283
      %v1285 = vrcp.pop %v1255
      %v1286 = vmul.f32 1.0, %v1285
      %v1287 = vrcp.pop %v1256
      %v1288 = vmul.f32 1.0, %v1287
      %v1289 = vsel %vm542, %v414, 0.0
      %1290 = vadd.xlane.f32.xlu0 %v1289
      %v1291 = vpop.xlane.xlu0 %1290
      %v1292 = vsel %vm542, %v415, 0.0
      %1293 = vadd.xlane.f32.xlu0 %v1292
      %v1294 = vpop.xlane.xlu0 %1293
      %v1295 = vsel %vm542, %v416, 0.0
      %1296 = vadd.xlane.f32.xlu0 %v1295
      %v1297 = vpop.xlane.xlu0 %1296
      %v1298 = vsel %vm542, %v417, 0.0
      %1299 = vadd.xlane.f32.xlu0 %v1298
      %v1300 = vpop.xlane.xlu0 %1299
      %v1301 = vsel %vm542, %v418, 0.0
      %1302 = vadd.xlane.f32.xlu0 %v1301
      %v1303 = vpop.xlane.xlu0 %1302
      %v1304 = vsel %vm542, %v419, 0.0
      %1305 = vadd.xlane.f32.xlu0 %v1304
      %v1306 = vpop.xlane.xlu0 %1305
      %v1307 = vsel %vm542, %v420, 0.0
      %1308 = vadd.xlane.f32.xlu0 %v1307
      %v1309 = vpop.xlane.xlu0 %1308
      %v1310 = vsel %vm542, %v421, 0.0
      %1311 = vadd.xlane.f32.xlu0 %v1310
      %v1312 = vpop.xlane.xlu0 %1311
      %v1313 = vsel %vm542, %v422, 0.0
      %1314 = vadd.xlane.f32.xlu0 %v1313
      %v1315 = vpop.xlane.xlu0 %1314
      %v1316 = vsel %vm542, %v423, 0.0
      %1317 = vadd.xlane.f32.xlu0 %v1316
      %v1318 = vpop.xlane.xlu0 %1317
      %v1319 = vsel %vm542, %v424, 0.0
      %1320 = vadd.xlane.f32.xlu0 %v1319
      %v1321 = vpop.xlane.xlu0 %1320
      %v1322 = vsel %vm542, %v425, 0.0
      %1323 = vadd.xlane.f32.xlu0 %v1322
      %v1324 = vpop.xlane.xlu0 %1323
      %v1325 = vsel %vm542, %v426, 0.0
      %1326 = vadd.xlane.f32.xlu0 %v1325
      %v1327 = vpop.xlane.xlu0 %1326
      %v1328 = vsel %vm542, %v427, 0.0
      %1329 = vadd.xlane.f32.xlu0 %v1328
      %v1330 = vpop.xlane.xlu0 %1329
      %v1331 = vsel %vm542, %v428, 0.0
      %1332 = vadd.xlane.f32.xlu0 %v1331
      %v1333 = vpop.xlane.xlu0 %1332
      %v1334 = vsel %vm542, %v429, 0.0
      %1335 = vadd.xlane.f32.xlu0 %v1334
      %v1336 = vpop.xlane.xlu0 %1335
      %v1337 = vrcp.pop 64.0
      %v1338 = vmul.f32 %v1291, %v1337
      %v1339 = vmul.f32 %v1294, %v1337
      %v1340 = vmul.f32 %v1297, %v1337
      %v1341 = vmul.f32 %v1300, %v1337
      %v1342 = vmul.f32 %v1303, %v1337
      %v1343 = vmul.f32 %v1306, %v1337
      %v1344 = vmul.f32 %v1309, %v1337
      %v1345 = vmul.f32 %v1312, %v1337
      %v1346 = vmul.f32 %v1315, %v1337
      %v1347 = vmul.f32 %v1318, %v1337
      %v1348 = vmul.f32 %v1321, %v1337
      %v1349 = vmul.f32 %v1324, %v1337
      %v1350 = vmul.f32 %v1327, %v1337
      %v1351 = vmul.f32 %v1330, %v1337
      %v1352 = vmul.f32 %v1333, %v1337
      %v1353 = vmul.f32 %v1336, %v1337
      %v1354 = vld [vmem:[%s8] sm:$0xff]
      %v1355 = vld [vmem:[%s8 + $0x8] sm:$0xff]
      %v1356 = vld [vmem:[%s8 + $0x10] sm:$0xff]
      %v1357 = vld [vmem:[%s8 + $0x18] sm:$0xff]
      %v1358 = vld [vmem:[%s8 + $0x20] sm:$0xff]
      %v1359 = vld [vmem:[%s8 + $0x28] sm:$0xff]
      %v1360 = vld [vmem:[%s8 + $0x30] sm:$0xff]
      %v1361 = vld [vmem:[%s8 + $0x38] sm:$0xff]
      %v1362 = vld [vmem:[%s9] sm:$0xff]
      %v1363 = vld [vmem:[%s9 + $0x8] sm:$0xff]
      %v1364 = vld [vmem:[%s9 + $0x10] sm:$0xff]
      %v1365 = vld [vmem:[%s9 + $0x18] sm:$0xff]
      %v1366 = vld [vmem:[%s9 + $0x20] sm:$0xff]
      %v1367 = vld [vmem:[%s9 + $0x28] sm:$0xff]
      %v1368 = vld [vmem:[%s9 + $0x30] sm:$0xff]
      %v1369 = vld [vmem:[%s9 + $0x38] sm:$0xff]
      %1370 = vmatprep.subr.mxu0 0.0
      %1371 = vmatpush1.msra.mxu0 %v1338
      %1372 = vmatprep.subr.mxu0 0.0
      %1373 = vmatpush1.msra.mxu0 %v1339
      %1374 = vmatprep.subr.mxu0 0.0
      %1375 = vmatpush1.msra.mxu0 %v1340
      %1376 = vmatprep.subr.mxu0 0.0
      %1377 = vmatpush1.msra.mxu0 %v1341
      %1378 = vmatprep.subr.mxu0 0.0
      %1379 = vmatpush1.msra.mxu0 %v1342
      %1380 = vmatprep.subr.mxu0 0.0
      %1381 = vmatpush1.msra.mxu0 %v1343
      %1382 = vmatprep.subr.mxu0 0.0
      %1383 = vmatpush1.msra.mxu0 %v1344
      %1384 = vmatprep.subr.mxu0 0.0
      %1385 = vmatpush1.msra.mxu0 %v1345
      %1386 = vmatprep.subr.mxu0 0.0
      %1387 = vmatpush1.msra.mxu0 %v1346
      %1388 = vmatprep.subr.mxu0 0.0
      %1389 = vmatpush1.msra.mxu0 %v1347
      %1390 = vmatprep.subr.mxu0 0.0
      %1391 = vmatpush1.msra.mxu0 %v1348
      %1392 = vmatprep.subr.mxu0 0.0
      %1393 = vmatpush1.msra.mxu0 %v1349
      %1394 = vmatprep.subr.mxu0 0.0
      %1395 = vmatpush1.msra.mxu0 %v1350
      %1396 = vmatprep.subr.mxu0 0.0
      %1397 = vmatpush1.msra.mxu0 %v1351
      %1398 = vmatprep.subr.mxu0 0.0
      %1399 = vmatpush1.msra.mxu0 %v1352
      %1400 = vmatprep.subr.mxu0 0.0
      %1401 = vmatpush1.msra.mxu0 %v1353
      %1402 = vmatprep.subr.mxu0 0.0
      %1403 = vmatpush1.msra.mxu0 0.0
      %1404 = vmatprep.subr.mxu0 0.0
      %1405 = vmatpush1.msra.mxu0 0.0
      %1406 = vmatprep.subr.mxu0 0.0
      %1407 = vmatpush1.msra.mxu0 0.0
      %1408 = vmatprep.subr.mxu0 0.0
      %1409 = vmatpush1.msra.mxu0 0.0
      %1410 = vmatprep.subr.mxu0 0.0
      %1411 = vmatpush1.msra.mxu0 0.0
      %1412 = vmatprep.subr.mxu0 0.0
      %1413 = vmatpush1.msra.mxu0 0.0
      %1414 = vmatprep.subr.mxu0 0.0
      %1415 = vmatpush1.msra.mxu0 0.0
      %1416 = vmatprep.subr.mxu0 0.0
      %1417 = vmatpush1.msra.mxu0 0.0
      %1418 = vmatprep.subr.mxu0 0.0
      %1419 = vmatpush1.msra.mxu0 0.0
      %1420 = vmatprep.subr.mxu0 0.0
      %1421 = vmatpush1.msra.mxu0 0.0
      %1422 = vmatprep.subr.mxu0 0.0
      %1423 = vmatpush1.msra.mxu0 0.0
      %1424 = vmatprep.subr.mxu0 0.0
      %1425 = vmatpush1.msra.mxu0 0.0
      %1426 = vmatprep.subr.mxu0 0.0
      %1427 = vmatpush1.msra.mxu0 0.0
      %1428 = vmatprep.subr.mxu0 0.0
      %1429 = vmatpush1.msra.mxu0 0.0
      %1430 = vmatprep.subr.mxu0 0.0
      %1431 = vmatpush1.msra.mxu0 0.0
      %1432 = vmatprep.subr.mxu0 0.0
      %1433 = vmatpush1.msra.mxu0 0.0
      %1434 = vmatprep.mubr.f32.mxu0 0.0
      %1435 = vmatmul.mubr.f32.gmra.mrb[0].mxu0 %v1354
      %v1436 = vpop.f32.mrb[0].mxu0
      %v1437 = vadd.f32 %v1362, %v1436
      %v1438 = vpop.f32.mrb[0].mxu0
      %1439 = vmatprep.mubr.f32.mxu0 0.0
      %1440 = vmatmul.mubr.f32.gmra.mrb[0].mxu0 %v1355
      %v1441 = vpop.f32.mrb[0].mxu0
      %v1442 = vadd.f32 %v1363, %v1441
      %v1443 = vpop.f32.mrb[0].mxu0
      %1444 = vmatprep.mubr.f32.mxu0 0.0
      %1445 = vmatmul.mubr.f32.gmra.mrb[0].mxu0 %v1356
      %v1446 = vpop.f32.mrb[0].mxu0
      %v1447 = vadd.f32 %v1364, %v1446
      %v1448 = vpop.f32.mrb[0].mxu0
      %1449 = vmatprep.mubr.f32.mxu0 0.0
      %1450 = vmatmul.mubr.f32.gmra.mrb[0].mxu0 %v1357
      %v1451 = vpop.f32.mrb[0].mxu0
      %v1452 = vadd.f32 %v1365, %v1451
      %v1453 = vpop.f32.mrb[0].mxu0
      %1454 = vmatprep.mubr.f32.mxu0 0.0
      %1455 = vmatmul.mubr.f32.gmra.mrb[0].mxu0 %v1358
      %v1456 = vpop.f32.mrb[0].mxu0
      %v1457 = vadd.f32 %v1366, %v1456
      %v1458 = vpop.f32.mrb[0].mxu0
      %1459 = vmatprep.mubr.f32.mxu0 0.0
      %1460 = vmatmul.mubr.f32.gmra.mrb[0].mxu0 %v1359
      %v1461 = vpop.f32.mrb[0].mxu0
      %v1462 = vadd.f32 %v1367, %v1461
      %v1463 = vpop.f32.mrb[0].mxu0
      %1464 = vmatprep.mubr.f32.mxu0 0.0
      %1465 = vmatmul.mubr.f32.gmra.mrb[0].mxu0 %v1360
      %v1466 = vpop.f32.mrb[0].mxu0
      %v1467 = vadd.f32 %v1368, %v1466
      %v1468 = vpop.f32.mrb[0].mxu0
      %1469 = vmatprep.mubr.f32.mxu0 0.0
      %1470 = vmatmul.mubr.f32.gmra.mrb[0].mxu0 %v1361
      %v1471 = vpop.f32.mrb[0].mxu0
      %v1472 = vadd.f32 %v1369, %v1471
      %v1473 = vpop.f32.mrb[0].mxu0
      %1474 = vdwg.mxu0
      %v1475 = vsel %vm1001, %v1437, -inf
      %v1476 = vsel %vm1001, %v1442, -inf
      %v1477 = vsel %vm1001, %v1447, -inf
      %v1478 = vsel %vm1001, %v1452, -inf
      %v1479 = vsel %vm1001, %v1457, -inf
      %v1480 = vmax.f32 %v1475, %v1479
      %v1481 = vsel %vm1001, %v1462, -inf
      %v1482 = vmax.f32 %v1476, %v1481
      %v1483 = vsel %vm1001, %v1467, -inf
      %v1484 = vmax.f32 %v1477, %v1483
      %v1485 = vsel %vm1001, %v1472, -inf
      %v1486 = vmax.f32 %v1478, %v1485
      %v1487 = vmax.f32 %v1480, %v1482
      %v1488 = vmax.f32 %v1484, %v1486
      %v1489 = vmax.f32 %v1487, %v1488
      %v1490 = vrot.slane %v1489, 4
      %v1491 = vmax.f32 %v1489, %v1490
      %v1492 = vrot.slane %v1491, 2
      %v1493 = vmax.f32 %v1491, %v1492
      %v1494 = vrot.slane %v1493, 1
      %v1495 = vmax.f32 %v1493, %v1494
      %v1496 = vsub.f32 %v1437, %v1495
      %v1497 = vsub.f32 %v1442, %v1495
      %v1498 = vsub.f32 %v1447, %v1495
      %v1499 = vsub.f32 %v1452, %v1495
      %v1500 = vsub.f32 %v1457, %v1495
      %v1501 = vsub.f32 %v1462, %v1495
      %v1502 = vsub.f32 %v1467, %v1495
      %v1503 = vsub.f32 %v1472, %v1495
      %v1504 = vmul.f32 %v1496, 1.442695
      %v1505 = vpow.pop %v1504
      %v1506 = vmul.f32 %v1497, 1.442695
      %v1507 = vpow.pop %v1506
      %v1508 = vmul.f32 %v1498, 1.442695
      %v1509 = vpow.pop %v1508
      %v1510 = vmul.f32 %v1499, 1.442695
      %v1511 = vpow.pop %v1510
      %v1512 = vmul.f32 %v1500, 1.442695
      %v1513 = vpow.pop %v1512
      %v1514 = vmul.f32 %v1501, 1.442695
      %v1515 = vpow.pop %v1514
      %v1516 = vmul.f32 %v1502, 1.442695
      %v1517 = vpow.pop %v1516
      %v1518 = vmul.f32 %v1503, 1.442695
      %v1519 = vpow.pop %v1518
      %v1520 = vsel %vm1001, %v1505, 0.0
      %v1521 = vsel %vm1001, %v1507, 0.0
      %v1522 = vadd.f32 %v1520, %v1521
      %v1523 = vsel %vm1001, %v1509, 0.0
      %v1524 = vadd.f32 %v1522, %v1523
      %v1525 = vsel %vm1001, %v1511, 0.0
      %v1526 = vadd.f32 %v1524, %v1525
      %v1527 = vsel %vm1001, %v1513, 0.0
      %v1528 = vadd.f32 %v1526, %v1527
      %v1529 = vsel %vm1001, %v1515, 0.0
      %v1530 = vadd.f32 %v1528, %v1529
      %v1531 = vsel %vm1001, %v1517, 0.0
      %v1532 = vadd.f32 %v1530, %v1531
      %v1533 = vsel %vm1001, %v1519, 0.0
      %v1534 = vadd.f32 %v1532, %v1533
      %v1535 = vrot.slane %v1534, 4
      %v1536 = vadd.f32 %v1534, %v1535
      %v1537 = vrot.slane %v1536, 2
      %v1538 = vadd.f32 %v1536, %v1537
      %v1539 = vrot.slane %v1538, 1
      %v1540 = vadd.f32 %v1538, %v1539
      %v1541 = vrcp.pop %v1540
      %v1542 = vmul.f32 %v1505, %v1541
      %v1543 = vmul.f32 %v1507, %v1541
      %v1544 = vmul.f32 %v1509, %v1541
      %v1545 = vmul.f32 %v1511, %v1541
      %v1546 = vmul.f32 %v1513, %v1541
      %v1547 = vmul.f32 %v1515, %v1541
      %v1548 = vmul.f32 %v1517, %v1541
      %v1549 = vmul.f32 %v1519, %v1541
      %v1550 = vld [vmem:[%s10] sm:$0xff]
      %v1551 = vld [vmem:[%s10 + $0x8] sm:$0xff]
      %v1552 = vld [vmem:[%s10 + $0x10] sm:$0xff]
      %v1553 = vld [vmem:[%s10 + $0x18] sm:$0xff]
      %v1554 = vld [vmem:[%s10 + $0x20] sm:$0xff]
      %v1555 = vld [vmem:[%s10 + $0x28] sm:$0xff]
      %v1556 = vld [vmem:[%s10 + $0x30] sm:$0xff]
      %v1557 = vld [vmem:[%s10 + $0x38] sm:$0xff]
      %v1558 = vld [vmem:[%s10 + $0x40] sm:$0xff]
      %v1559 = vld [vmem:[%s10 + $0x48] sm:$0xff]
      %v1560 = vld [vmem:[%s10 + $0x50] sm:$0xff]
      %v1561 = vld [vmem:[%s10 + $0x58] sm:$0xff]
      %v1562 = vld [vmem:[%s10 + $0x60] sm:$0xff]
      %v1563 = vld [vmem:[%s10 + $0x68] sm:$0xff]
      %v1564 = vld [vmem:[%s10 + $0x70] sm:$0xff]
      %v1565 = vld [vmem:[%s10 + $0x78] sm:$0xff]
      %v1567 = vsel %vm542, %v1550, 0
      %v1570 = vsel %vm542, %v1551, 0
      %v1573 = vsel %vm542, %v1552, 0
      %v1576 = vsel %vm542, %v1553, 0
      %v1579 = vsel %vm542, %v1554, 0
      %v1582 = vsel %vm542, %v1555, 0
      %v1585 = vsel %vm542, %v1556, 0
      %v1588 = vsel %vm542, %v1557, 0
      %v1591 = vsel %vm542, %v1558, 0
      %v1594 = vsel %vm542, %v1559, 0
      %v1597 = vsel %vm542, %v1560, 0
      %v1600 = vsel %vm542, %v1561, 0
      %v1603 = vsel %vm542, %v1562, 0
      %v1606 = vsel %vm542, %v1563, 0
      %v1609 = vsel %vm542, %v1564, 0
      %v1612 = vsel %vm542, %v1565, 0
      %1614 = vmatprep.subr.mxu0 0.0
      %1615 = vmatpush1.msra.mxu0 %v1542
      %1616 = vmatprep.subr.mxu0 0.0
      %1617 = vmatpush1.msra.mxu0 %v1543
      %1618 = vmatprep.subr.mxu0 0.0
      %1619 = vmatpush1.msra.mxu0 %v1544
      %1620 = vmatprep.subr.mxu0 0.0
      %1621 = vmatpush1.msra.mxu0 %v1545
      %1622 = vmatprep.subr.mxu0 0.0
      %1623 = vmatpush1.msra.mxu0 %v1546
      %1624 = vmatprep.subr.mxu0 0.0
      %1625 = vmatpush1.msra.mxu0 %v1547
      %1626 = vmatprep.subr.mxu0 0.0
      %1627 = vmatpush1.msra.mxu0 %v1548
      %1628 = vmatprep.subr.mxu0 0.0
      %1629 = vmatpush1.msra.mxu0 %v1549
      %1630 = vmatprep.subr.mxu0 0.0
      %1631 = vmatpush1.msra.mxu0 0.0
      %1632 = vmatprep.subr.mxu0 0.0
      %1633 = vmatpush1.msra.mxu0 0.0
      %1634 = vmatprep.subr.mxu0 0.0
      %1635 = vmatpush1.msra.mxu0 0.0
      %1636 = vmatprep.subr.mxu0 0.0
      %1637 = vmatpush1.msra.mxu0 0.0
      %1638 = vmatprep.subr.mxu0 0.0
      %1639 = vmatpush1.msra.mxu0 0.0
      %1640 = vmatprep.subr.mxu0 0.0
      %1641 = vmatpush1.msra.mxu0 0.0
      %1642 = vmatprep.subr.mxu0 0.0
      %1643 = vmatpush1.msra.mxu0 0.0
      %1644 = vmatprep.subr.mxu0 0.0
      %1645 = vmatpush1.msra.mxu0 0.0
      %1646 = vmatprep.subr.mxu0 0.0
      %1647 = vmatpush1.msra.mxu0 0.0
      %1648 = vmatprep.subr.mxu0 0.0
      %1649 = vmatpush1.msra.mxu0 0.0
      %1650 = vmatprep.subr.mxu0 0.0
      %1651 = vmatpush1.msra.mxu0 0.0
      %1652 = vmatprep.subr.mxu0 0.0
      %1653 = vmatpush1.msra.mxu0 0.0
      %1654 = vmatprep.subr.mxu0 0.0
      %1655 = vmatpush1.msra.mxu0 0.0
      %1656 = vmatprep.subr.mxu0 0.0
      %1657 = vmatpush1.msra.mxu0 0.0
      %1658 = vmatprep.subr.mxu0 0.0
      %1659 = vmatpush1.msra.mxu0 0.0
      %1660 = vmatprep.subr.mxu0 0.0
      %1661 = vmatpush1.msra.mxu0 0.0
      %1662 = vmatprep.subr.mxu0 0.0
      %1663 = vmatpush1.msra.mxu0 0.0
      %1664 = vmatprep.subr.mxu0 0.0
      %1665 = vmatpush1.msra.mxu0 0.0
      %1666 = vmatprep.subr.mxu0 0.0
      %1667 = vmatpush1.msra.mxu0 0.0
      %1668 = vmatprep.subr.mxu0 0.0
      %1669 = vmatpush1.msra.mxu0 0.0
      %1670 = vmatprep.subr.mxu0 0.0
      %1671 = vmatpush1.msra.mxu0 0.0
      %1672 = vmatprep.subr.mxu0 0.0
      %1673 = vmatpush1.msra.mxu0 0.0
      %1674 = vmatprep.subr.mxu0 0.0
      %1675 = vmatpush1.msra.mxu0 0.0
      %1676 = vmatprep.subr.mxu0 0.0
      %1677 = vmatpush1.msra.mxu0 0.0
      %1678 = vmatprep.mubr.f32.mxu0 0.0
      %1679 = vmatmul.mubr.f32.gmra.mrb[0].mxu0 %v1567
      %v1680 = vpop.f32.mrb[0].mxu0
      %v1681 = vadd.f32 0.0, %v1680
      %v1682 = vpop.f32.mrb[0].mxu0
      %1683 = vmatprep.mubr.f32.mxu0 0.0
      %1684 = vmatmul.mubr.f32.gmra.mrb[0].mxu0 %v1570
      %v1685 = vpop.f32.mrb[0].mxu0
      %v1686 = vadd.f32 0.0, %v1685
      %v1687 = vpop.f32.mrb[0].mxu0
      %1688 = vmatprep.mubr.f32.mxu0 0.0
      %1689 = vmatmul.mubr.f32.gmra.mrb[0].mxu0 %v1573
      %v1690 = vpop.f32.mrb[0].mxu0
      %v1691 = vadd.f32 0.0, %v1690
      %v1692 = vpop.f32.mrb[0].mxu0
      %1693 = vmatprep.mubr.f32.mxu0 0.0
      %1694 = vmatmul.mubr.f32.gmra.mrb[0].mxu0 %v1576
      %v1695 = vpop.f32.mrb[0].mxu0
      %v1696 = vadd.f32 0.0, %v1695
      %v1697 = vpop.f32.mrb[0].mxu0
      %1698 = vmatprep.mubr.f32.mxu0 0.0
      %1699 = vmatmul.mubr.f32.gmra.mrb[0].mxu0 %v1579
      %v1700 = vpop.f32.mrb[0].mxu0
      %v1701 = vadd.f32 0.0, %v1700
      %v1702 = vpop.f32.mrb[0].mxu0
      %1703 = vmatprep.mubr.f32.mxu0 0.0
      %1704 = vmatmul.mubr.f32.gmra.mrb[0].mxu0 %v1582
      %v1705 = vpop.f32.mrb[0].mxu0
      %v1706 = vadd.f32 0.0, %v1705
      %v1707 = vpop.f32.mrb[0].mxu0
      %1708 = vmatprep.mubr.f32.mxu0 0.0
      %1709 = vmatmul.mubr.f32.gmra.mrb[0].mxu0 %v1585
      %v1710 = vpop.f32.mrb[0].mxu0
      %v1711 = vadd.f32 0.0, %v1710
      %v1712 = vpop.f32.mrb[0].mxu0
      %1713 = vmatprep.mubr.f32.mxu0 0.0
      %1714 = vmatmul.mubr.f32.gmra.mrb[0].mxu0 %v1588
      %v1715 = vpop.f32.mrb[0].mxu0
      %v1716 = vadd.f32 0.0, %v1715
      %v1717 = vpop.f32.mrb[0].mxu0
      %1718 = vmatprep.mubr.f32.mxu0 0.0
      %1719 = vmatmul.mubr.f32.gmra.mrb[0].mxu0 %v1591
      %v1720 = vpop.f32.mrb[0].mxu0
      %v1721 = vadd.f32 0.0, %v1720
      %v1722 = vpop.f32.mrb[0].mxu0
      %1723 = vmatprep.mubr.f32.mxu0 0.0
      %1724 = vmatmul.mubr.f32.gmra.mrb[0].mxu0 %v1594
      %v1725 = vpop.f32.mrb[0].mxu0
      %v1726 = vadd.f32 0.0, %v1725
      %v1727 = vpop.f32.mrb[0].mxu0
      %1728 = vmatprep.mubr.f32.mxu0 0.0
      %1729 = vmatmul.mubr.f32.gmra.mrb[0].mxu0 %v1597
      %v1730 = vpop.f32.mrb[0].mxu0
      %v1731 = vadd.f32 0.0, %v1730
      %v1732 = vpop.f32.mrb[0].mxu0
      %1733 = vmatprep.mubr.f32.mxu0 0.0
      %1734 = vmatmul.mubr.f32.gmra.mrb[0].mxu0 %v1600
      %v1735 = vpop.f32.mrb[0].mxu0
      %v1736 = vadd.f32 0.0, %v1735
      %v1737 = vpop.f32.mrb[0].mxu0
      %1738 = vmatprep.mubr.f32.mxu0 0.0
      %1739 = vmatmul.mubr.f32.gmra.mrb[0].mxu0 %v1603
      %v1740 = vpop.f32.mrb[0].mxu0
      %v1741 = vadd.f32 0.0, %v1740
      %v1742 = vpop.f32.mrb[0].mxu0
      %1743 = vmatprep.mubr.f32.mxu0 0.0
      %1744 = vmatmul.mubr.f32.gmra.mrb[0].mxu0 %v1606
      %v1745 = vpop.f32.mrb[0].mxu0
      %v1746 = vadd.f32 0.0, %v1745
      %v1747 = vpop.f32.mrb[0].mxu0
      %1748 = vmatprep.mubr.f32.mxu0 0.0
      %1749 = vmatmul.mubr.f32.gmra.mrb[0].mxu0 %v1609
      %v1750 = vpop.f32.mrb[0].mxu0
      %v1751 = vadd.f32 0.0, %v1750
      %v1752 = vpop.f32.mrb[0].mxu0
      %1753 = vmatprep.mubr.f32.mxu0 0.0
      %1754 = vmatmul.mubr.f32.gmra.mrb[0].mxu0 %v1612
      %v1755 = vpop.f32.mrb[0].mxu0
      %v1756 = vadd.f32 0.0, %v1755
      %v1757 = vpop.f32.mrb[0].mxu0
      %1758 = vdwg.mxu0
      %v1759 = vld [vmem:[%s11] sm:$0xff]
      %v1760 = vld [vmem:[%s11 + $0x8] sm:$0xff]
      %v1761 = vld [vmem:[%s11 + $0x10] sm:$0xff]
      %v1762 = vld [vmem:[%s11 + $0x18] sm:$0xff]
      %v1763 = vld [vmem:[%s11 + $0x20] sm:$0xff]
      %v1764 = vld [vmem:[%s11 + $0x28] sm:$0xff]
      %v1765 = vld [vmem:[%s11 + $0x30] sm:$0xff]
      %v1766 = vld [vmem:[%s11 + $0x38] sm:$0xff]
      %v1767 = vmul.f32 %v1759, %v1542
      %v1768 = vmul.f32 %v1760, %v1543
      %v1769 = vmul.f32 %v1761, %v1544
      %v1770 = vmul.f32 %v1762, %v1545
      %v1771 = vmul.f32 %v1763, %v1546
      %v1772 = vmul.f32 %v1764, %v1547
      %v1773 = vmul.f32 %v1765, %v1548
      %v1774 = vmul.f32 %v1766, %v1549
      %v1775 = vsel %vm1001, %v1767, 0.0
      %v1776 = vsel %vm1001, %v1768, 0.0
      %v1777 = vadd.f32 %v1775, %v1776
      %v1778 = vsel %vm1001, %v1769, 0.0
      %v1779 = vadd.f32 %v1777, %v1778
      %v1780 = vsel %vm1001, %v1770, 0.0
      %v1781 = vadd.f32 %v1779, %v1780
      %v1782 = vsel %vm1001, %v1771, 0.0
      %v1783 = vadd.f32 %v1781, %v1782
      %v1784 = vsel %vm1001, %v1772, 0.0
      %v1785 = vadd.f32 %v1783, %v1784
      %v1786 = vsel %vm1001, %v1773, 0.0
      %v1787 = vadd.f32 %v1785, %v1786
      %v1788 = vsel %vm1001, %v1774, 0.0
      %v1789 = vadd.f32 %v1787, %v1788
      %v1790 = vrot.slane %v1789, 4
      %v1791 = vadd.f32 %v1789, %v1790
      %v1792 = vrot.slane %v1791, 2
      %v1793 = vadd.f32 %v1791, %v1792
      %v1794 = vrot.slane %v1793, 1
      %v1795 = vadd.f32 %v1793, %v1794
      %1797 = vset.pattern.permute.xlu0 0
      %1798 = vperm.xlu0 %1797, %v1681
      %v1799 = vpop.permute.xlu0 %1798
      %1802 = vset.pattern.permute.xlu0 0
      %1803 = vperm.xlu0 %1802, %v1686
      %v1804 = vpop.permute.xlu0 %1803
      %1807 = vset.pattern.permute.xlu0 0
      %1808 = vperm.xlu0 %1807, %v1691
      %v1809 = vpop.permute.xlu0 %1808
      %1812 = vset.pattern.permute.xlu0 0
      %1813 = vperm.xlu0 %1812, %v1696
      %v1814 = vpop.permute.xlu0 %1813
      %1817 = vset.pattern.permute.xlu0 0
      %1818 = vperm.xlu0 %1817, %v1701
      %v1819 = vpop.permute.xlu0 %1818
      %1822 = vset.pattern.permute.xlu0 0
      %1823 = vperm.xlu0 %1822, %v1706
      %v1824 = vpop.permute.xlu0 %1823
      %1827 = vset.pattern.permute.xlu0 0
      %1828 = vperm.xlu0 %1827, %v1711
      %v1829 = vpop.permute.xlu0 %1828
      %1832 = vset.pattern.permute.xlu0 0
      %1833 = vperm.xlu0 %1832, %v1716
      %v1834 = vpop.permute.xlu0 %1833
      %1837 = vset.pattern.permute.xlu0 0
      %1838 = vperm.xlu0 %1837, %v1721
      %v1839 = vpop.permute.xlu0 %1838
      %1842 = vset.pattern.permute.xlu0 0
      %1843 = vperm.xlu0 %1842, %v1726
      %v1844 = vpop.permute.xlu0 %1843
      %1847 = vset.pattern.permute.xlu0 0
      %1848 = vperm.xlu0 %1847, %v1731
      %v1849 = vpop.permute.xlu0 %1848
      %1852 = vset.pattern.permute.xlu0 0
      %1853 = vperm.xlu0 %1852, %v1736
      %v1854 = vpop.permute.xlu0 %1853
      %1857 = vset.pattern.permute.xlu0 0
      %1858 = vperm.xlu0 %1857, %v1741
      %v1859 = vpop.permute.xlu0 %1858
      %1862 = vset.pattern.permute.xlu0 0
      %1863 = vperm.xlu0 %1862, %v1746
      %v1864 = vpop.permute.xlu0 %1863
      %1867 = vset.pattern.permute.xlu0 0
      %1868 = vperm.xlu0 %1867, %v1751
      %v1869 = vpop.permute.xlu0 %1868
      %1872 = vset.pattern.permute.xlu0 0
      %1873 = vperm.xlu0 %1872, %v1756
      %v1874 = vpop.permute.xlu0 %1873
      %v1876 = vmul.f32 %v414, %v1799
      %v1877 = vmul.f32 %v415, %v1804
      %v1878 = vmul.f32 %v416, %v1809
      %v1879 = vmul.f32 %v417, %v1814
      %v1880 = vmul.f32 %v418, %v1819
      %v1881 = vmul.f32 %v419, %v1824
      %v1882 = vmul.f32 %v420, %v1829
      %v1883 = vmul.f32 %v421, %v1834
      %v1884 = vmul.f32 %v422, %v1839
      %v1885 = vmul.f32 %v423, %v1844
      %v1886 = vmul.f32 %v424, %v1849
      %v1887 = vmul.f32 %v425, %v1854
      %v1888 = vmul.f32 %v426, %v1859
      %v1889 = vmul.f32 %v427, %v1864
      %v1890 = vmul.f32 %v428, %v1869
      %v1891 = vmul.f32 %v429, %v1874
      %v1892 = vsel %vm542, %v1876, 0.0
      %v1893 = vsel %vm542, %v1877, 0.0
      %v1894 = vadd.f32 %v1892, %v1893
      %v1895 = vsel %vm542, %v1878, 0.0
      %v1896 = vadd.f32 %v1894, %v1895
      %v1897 = vsel %vm542, %v1879, 0.0
      %v1898 = vadd.f32 %v1896, %v1897
      %v1899 = vsel %vm542, %v1880, 0.0
      %v1900 = vadd.f32 %v1898, %v1899
      %v1901 = vsel %vm542, %v1881, 0.0
      %v1902 = vadd.f32 %v1900, %v1901
      %v1903 = vsel %vm542, %v1882, 0.0
      %v1904 = vadd.f32 %v1902, %v1903
      %v1905 = vsel %vm542, %v1883, 0.0
      %v1906 = vadd.f32 %v1904, %v1905
      %v1907 = vsel %vm542, %v1884, 0.0
      %v1908 = vadd.f32 %v1906, %v1907
      %v1909 = vsel %vm542, %v1885, 0.0
      %v1910 = vadd.f32 %v1908, %v1909
      %v1911 = vsel %vm542, %v1886, 0.0
      %v1912 = vadd.f32 %v1910, %v1911
      %v1913 = vsel %vm542, %v1887, 0.0
      %v1914 = vadd.f32 %v1912, %v1913
      %v1915 = vsel %vm542, %v1888, 0.0
      %v1916 = vadd.f32 %v1914, %v1915
      %v1917 = vsel %vm542, %v1889, 0.0
      %v1918 = vadd.f32 %v1916, %v1917
      %v1919 = vsel %vm542, %v1890, 0.0
      %v1920 = vadd.f32 %v1918, %v1919
      %v1921 = vsel %vm542, %v1891, 0.0
      %v1922 = vadd.f32 %v1920, %v1921
      %v1923 = vrot.slane %v1922, 4
      %v1924 = vadd.f32 %v1922, %v1923
      %v1925 = vrot.slane %v1924, 2
      %v1926 = vadd.f32 %v1924, %v1925
      %v1927 = vrot.slane %v1926, 1
      %v1928 = vadd.f32 %v1926, %v1927
      %1930 = vset.pattern.permute.xlu0 0
      %1931 = vperm.xlu0 %1930, %v1795
      %v1932 = vpop.permute.xlu0 %1931
      %v1934 = vadd.f32 %v1928, %v1932
      %v1935 = vxor.u32 %v1934, 2147483648
      %v1936 = vmul.f32 %v1935, 1.442695
      %v1937 = vpow.pop %v1936
      %v1938 = vadd.f32 %v1937, 1.0
      %v1939 = vrcp.pop %v1938
      %v1940 = vmul.f32 1.0, %v1939
      %1942 = vset.pattern.permute.xlu0 0
      %1943 = vperm.xlu0 %1942, %v1258
      %v1944 = vpop.permute.xlu0 %1943
      %1947 = vset.pattern.permute.xlu0 0
      %1948 = vperm.xlu0 %1947, %v1260
      %v1949 = vpop.permute.xlu0 %1948
      %1952 = vset.pattern.permute.xlu0 0
      %1953 = vperm.xlu0 %1952, %v1262
      %v1954 = vpop.permute.xlu0 %1953
      %1957 = vset.pattern.permute.xlu0 0
      %1958 = vperm.xlu0 %1957, %v1264
      %v1959 = vpop.permute.xlu0 %1958
      %1962 = vset.pattern.permute.xlu0 0
      %1963 = vperm.xlu0 %1962, %v1266
      %v1964 = vpop.permute.xlu0 %1963
      %1967 = vset.pattern.permute.xlu0 0
      %1968 = vperm.xlu0 %1967, %v1268
      %v1969 = vpop.permute.xlu0 %1968
      %1972 = vset.pattern.permute.xlu0 0
      %1973 = vperm.xlu0 %1972, %v1270
      %v1974 = vpop.permute.xlu0 %1973
      %1977 = vset.pattern.permute.xlu0 0
      %1978 = vperm.xlu0 %1977, %v1272
      %v1979 = vpop.permute.xlu0 %1978
      %1982 = vset.pattern.permute.xlu0 0
      %1983 = vperm.xlu0 %1982, %v1274
      %v1984 = vpop.permute.xlu0 %1983
      %1987 = vset.pattern.permute.xlu0 0
      %1988 = vperm.xlu0 %1987, %v1276
      %v1989 = vpop.permute.xlu0 %1988
      %1992 = vset.pattern.permute.xlu0 0
      %1993 = vperm.xlu0 %1992, %v1278
      %v1994 = vpop.permute.xlu0 %1993
      %1997 = vset.pattern.permute.xlu0 0
      %1998 = vperm.xlu0 %1997, %v1280
      %v1999 = vpop.permute.xlu0 %1998
      %2002 = vset.pattern.permute.xlu0 0
      %2003 = vperm.xlu0 %2002, %v1282
      %v2004 = vpop.permute.xlu0 %2003
      %2007 = vset.pattern.permute.xlu0 0
      %2008 = vperm.xlu0 %2007, %v1284
      %v2009 = vpop.permute.xlu0 %2008
      %2012 = vset.pattern.permute.xlu0 0
      %2013 = vperm.xlu0 %2012, %v1286
      %v2014 = vpop.permute.xlu0 %2013
      %2017 = vset.pattern.permute.xlu0 0
      %2018 = vperm.xlu0 %2017, %v1288
      %v2019 = vpop.permute.xlu0 %2018
      %v2021 = vadd.f32 %v1940, %v1944
      %v2022 = vadd.f32 %v1940, %v1949
      %v2023 = vadd.f32 %v1940, %v1954
      %v2024 = vadd.f32 %v1940, %v1959
      %v2025 = vadd.f32 %v1940, %v1964
      %v2026 = vadd.f32 %v1940, %v1969
      %v2027 = vadd.f32 %v1940, %v1974
      %v2028 = vadd.f32 %v1940, %v1979
      %v2029 = vadd.f32 %v1940, %v1984
      %v2030 = vadd.f32 %v1940, %v1989
      %v2031 = vadd.f32 %v1940, %v1994
      %v2032 = vadd.f32 %v1940, %v1999
      %v2033 = vadd.f32 %v1940, %v2004
      %v2034 = vadd.f32 %v1940, %v2009
      %v2035 = vadd.f32 %v1940, %v2014
      %v2036 = vadd.f32 %v1940, %v2019
      %v2037 = vadd.f32 %v2021, 2.0
      %v2038 = vadd.f32 %v2022, 2.0
      %v2039 = vadd.f32 %v2023, 2.0
      %v2040 = vadd.f32 %v2024, 2.0
      %v2041 = vadd.f32 %v2025, 2.0
      %v2042 = vadd.f32 %v2026, 2.0
      %v2043 = vadd.f32 %v2027, 2.0
      %v2044 = vadd.f32 %v2028, 2.0
      %v2045 = vadd.f32 %v2029, 2.0
      %v2046 = vadd.f32 %v2030, 2.0
      %v2047 = vadd.f32 %v2031, 2.0
      %v2048 = vadd.f32 %v2032, 2.0
      %v2049 = vadd.f32 %v2033, 2.0
      %v2050 = vadd.f32 %v2034, 2.0
      %v2051 = vadd.f32 %v2035, 2.0
      %v2052 = vadd.f32 %v2036, 2.0
      %v2053 = vmul.f32 %v414, %v2037
      %v2054 = vmul.f32 %v415, %v2038
      %v2055 = vmul.f32 %v416, %v2039
      %v2056 = vmul.f32 %v417, %v2040
      %v2057 = vmul.f32 %v418, %v2041
      %v2058 = vmul.f32 %v419, %v2042
      %v2059 = vmul.f32 %v420, %v2043
      %v2060 = vmul.f32 %v421, %v2044
      %v2061 = vmul.f32 %v422, %v2045
      %v2062 = vmul.f32 %v423, %v2046
      %v2063 = vmul.f32 %v424, %v2047
      %v2064 = vmul.f32 %v425, %v2048
      %v2065 = vmul.f32 %v426, %v2049
      %v2066 = vmul.f32 %v427, %v2050
      %v2067 = vmul.f32 %v428, %v2051
      %v2068 = vmul.f32 %v429, %v2052
      %2069 = vst.msk [vmem:[%s413] sm:$0xff] %vm542, %v2053
      %2070 = vst.msk [vmem:[%s413 + $0x8] sm:$0xff] %vm542, %v2054
      %2071 = vst.msk [vmem:[%s413 + $0x10] sm:$0xff] %vm542, %v2055
      %2072 = vst.msk [vmem:[%s413 + $0x18] sm:$0xff] %vm542, %v2056
      %2073 = vst.msk [vmem:[%s413 + $0x20] sm:$0xff] %vm542, %v2057
      %2074 = vst.msk [vmem:[%s413 + $0x28] sm:$0xff] %vm542, %v2058
      %2075 = vst.msk [vmem:[%s413 + $0x30] sm:$0xff] %vm542, %v2059
      %2076 = vst.msk [vmem:[%s413 + $0x38] sm:$0xff] %vm542, %v2060
      %2077 = vst.msk [vmem:[%s413 + $0x40] sm:$0xff] %vm542, %v2061
      %2078 = vst.msk [vmem:[%s413 + $0x48] sm:$0xff] %vm542, %v2062
      %2079 = vst.msk [vmem:[%s413 + $0x50] sm:$0xff] %vm542, %v2063
      %2080 = vst.msk [vmem:[%s413 + $0x58] sm:$0xff] %vm542, %v2064
      %2081 = vst.msk [vmem:[%s413 + $0x60] sm:$0xff] %vm542, %v2065
      %2082 = vst.msk [vmem:[%s413 + $0x68] sm:$0xff] %vm542, %v2066
      %2083 = vst.msk [vmem:[%s413 + $0x70] sm:$0xff] %vm542, %v2067
      %2084 = vst.msk [vmem:[%s413 + $0x78] sm:$0xff] %vm542, %v2068
      %p2085 = scmp.lt.s32.totalorder %s23, 1
      %s2086 = scalar_select %p2085, %s23, 1
      %s2087 = smul.addr %s2086, 16
      %s2088 = smul.addr %s2087, 8
      %s2089 = scalar_lea.vmem %s12, %s2088
      // Predicated region
      $region69: #{parallel_attention_pallas.1} parent=67 // pred_check
        %p2090 = pneg %p298
      $region70: #{parallel_attention_pallas.1} parent=67 // pred_check_branch
        %2092 = sbr.rel (%p2090) target = $region72
      $region71: #{parallel_attention_pallas.1} parent=67 // pred_region
        _
      $region72: #{parallel_attention_pallas.1} parent=67 // pred_fallthru
        _
    $region68: #{parallel_attention_pallas.1} parent=5 // pred_fallthru
      _
    %p2093 = scmp.le.s32.totalorder 2, %s18
    // Predicated region
    $region73: #{parallel_attention_pallas.1} parent=5 // pred_check
      %p2094 = pneg %p2093
    $region74: #{parallel_attention_pallas.1} parent=5 // pred_check_branch
      %2096 = sbr.rel (%p2094) target = $region76
    $region75: #{parallel_attention_pallas.1} parent=5 // pred_region
      %s2097 = ssub.s32 %s18, 2
      // Predicated region
      $region77: #{parallel_attention_pallas.1} parent=75 // pred_check
        %p2098 = pneg %p304
      $region78: #{parallel_attention_pallas.1} parent=75 // pred_check_branch
        %2100 = sbr.rel (%p2098) target = $region80
      $region79: #{parallel_attention_pallas.1} parent=75 // pred_region
        %p2101 = scmp.lt.s32.totalorder %s24, 1
        %s2102 = scalar_select %p2101, %s24, 1
        %s2103 = smul.addr %s2102, 16
        %s2104 = smul.addr %s2103, 8
        %s2105 = scalar_lea.vmem %s12, %s2104
      $region80: #{parallel_attention_pallas.1} parent=75 // pred_fallthru
        _
    $region76: #{parallel_attention_pallas.1} parent=5 // pred_fallthru
      _
  $region6: #{parallel_attention_pallas.1} parent=0 // loop_footer
    %s22 = sadd.s32 1, %s18
  $region7: #{parallel_attention_pallas.1} parent=0 // loop_footer_branch
    %17 = sbr.rel target = $region3
  $region8: #{parallel_attention_pallas.1} parent=0 // loop_exit
    _

</llo_original>
